<compile_context>
chip_gen: v5e
topology: v5e:2x2
jax: 0.10.0
libtpu: 0.0.40
codegen_flags: <defaults>
</compile_context>

<pallas_src>
import functools
import math

import jax
import jax.numpy as jnp
from jax.experimental import pallas as pl
from jax.experimental.pallas import tpu as pltpu


# =============================================================================
# Single fused kernel: full VideoTransformer forward for one batch element.
# =============================================================================
def fused_forward_kernel(x_ref, weff_ref, bias_ref, wqkv_ref, waux_ref,
                         vec_ref, mask_ref, wcls_ref, bcls_ref, out_ref):
    T = x_ref.shape[1]
    C, H = wcls_ref.shape
    L = wqkv_ref.shape[0]            # one fused (H, 6H) QKV slab per layer

    # ---- AdaptiveAvgPool2d(1) + PositionalEncoding + per-class Linear+ReLU ----
    # pool folded into weff, PE projected into bias -> a single lane-dense matmul
    y = jnp.dot(x_ref[0], weff_ref[...], preferred_element_type=jnp.float32)
    y = jnp.maximum(y + bias_ref[...], 0.0)                         # (T, C*H)
    # repack lane-blocked classes into a class-major token slab: row = c*T + t
    feat = jnp.concatenate([y[:, c * H:(c + 1) * H] for c in range(C)], axis=0)

    def layer_norm(z, gamma, beta):
        mu = jnp.mean(z, axis=-1, keepdims=True)
        var = jnp.mean(jnp.square(z - mu), axis=-1, keepdims=True)
        return (z - mu) * jax.lax.rsqrt(var + 1e-5) * gamma + beta

    def encoder(s, qkv, idx, mask):
        # s: (C*T, H) tokens; qkv: (C*T, 3H) pre-projected (1/sqrt(H) folded in Wq)
        q = qkv[:, 0:H] + vec_ref[idx, 0]
        k = qkv[:, H:2 * H] + vec_ref[idx, 1]
        v = qkv[:, 2 * H:3 * H] + vec_ref[idx, 2]
        scores = jax.lax.dot_general(q, k, (((1,), (1,)), ((), ())),
                                     preferred_element_type=jnp.float32) + mask
        scores = scores - jnp.max(scores, axis=-1, keepdims=True)
        e = jnp.exp(scores)
        p = e * pl.reciprocal(jnp.sum(e, axis=-1, keepdims=True), approx=True)
        att = jnp.dot(p, v, preferred_element_type=jnp.float32)
        src2 = jnp.maximum(
            jnp.dot(att, waux_ref[3 * idx + 0], preferred_element_type=jnp.float32)
            + vec_ref[idx, 3], 0.0)                               # relu(out(.))
        xn = layer_norm(s + src2, vec_ref[idx, 6], vec_ref[idx, 7])
        hid = jnp.maximum(
            jnp.dot(xn, waux_ref[3 * idx + 1], preferred_element_type=jnp.float32)
            + vec_ref[idx, 4], 0.0)
        ff = jnp.dot(hid, waux_ref[3 * idx + 2],
                     preferred_element_type=jnp.float32) + vec_ref[idx, 5]
        return layer_norm(xn + ff, vec_ref[idx, 8], vec_ref[idx, 9])

    mask_same_c = mask_ref[0]    # attention over T (tokens sharing a class)
    mask_same_t = mask_ref[1]    # attention over C (tokens sharing a time step)

    for l in range(L):
        # one fused QKV projection for BOTH encoder branches of this layer
        qkv6 = jnp.dot(feat, wqkv_ref[l], preferred_element_type=jnp.float32)
        eo1 = encoder(feat, qkv6[:, 0:3 * H], 2 * l, mask_same_c)      # enc1[l]
        eo2 = encoder(feat, qkv6[:, 3 * H:6 * H], 2 * l + 1, mask_same_t)  # enc2[l]
        # sigmoid(alpha_l) and 1-sigmoid(alpha_l) pre-broadcast into vec row 10
        feat = eo1 * vec_ref[2 * l, 10] + eo2 * vec_ref[2 * l + 1, 10]

    # ---- per-class Linear(H, 1) classifier + max over time ----
    feat3 = feat.reshape(C, T, H)
    logits = jnp.sum(feat3 * wcls_ref[...][:, None, :], axis=-1) + bcls_ref[...]
    out_ref[0, 0] = jnp.max(logits, axis=-1)           # (C,)


# =============================================================================
# Forward wrapper: one pallas_call, grid over the batch.
# =============================================================================
def video_transformer_forward(x, packed, *, num_segments, num_classes,
                              num_features, hidden_dim, num_layers):
    nt, chw = x.shape
    T, C, H, L = num_segments, num_classes, hidden_dim, num_layers
    F_ = num_features
    hw = chw // F_
    B = nt // T
    N = C * T
    CH = C * H
    x3 = x.reshape(B, T, F_ * hw)                      # contiguous reshape only

    out = pl.pallas_call(
        fused_forward_kernel,
        out_shape=jax.ShapeDtypeStruct((B, 1, C), jnp.float32),
        grid=(B,),
        in_specs=[
            pl.BlockSpec((1, T, F_ * hw), lambda b: (b, 0, 0)),
            pl.BlockSpec((F_ * hw, CH), lambda b: (0, 0)),
            pl.BlockSpec((T, CH), lambda b: (0, 0)),
            pl.BlockSpec((L, H, 6 * H), lambda b: (0, 0, 0)),
            pl.BlockSpec((6 * L, H, H), lambda b: (0, 0, 0)),
            pl.BlockSpec((2 * L, 11, H), lambda b: (0, 0, 0)),
            pl.BlockSpec((2, N, N), lambda b: (0, 0, 0)),
            pl.BlockSpec((C, H), lambda b: (0, 0)),
            pl.BlockSpec((C, 1), lambda b: (0, 0)),
        ],
        out_specs=pl.BlockSpec((1, 1, C), lambda b: (b, 0, 0)),
        compiler_params=pltpu.CompilerParams(
            dimension_semantics=("parallel",)),        # B>=2 -> both v7x TCs busy
    )(x3, packed['w_eff'], packed['bias'], packed['w_qkv'], packed['w_aux'],
      packed['vecs'], packed['masks'], packed['w_cls'], packed['b_cls'])
    return out[:, 0, :]


# =============================================================================
# Host-side weight packing (done once): fold pool / PE / 1/sqrt(H) scale into
# weights, stack the per-encoder tensors into 3 arrays, build group masks.
# =============================================================================
def pack_params(params, *, num_segments, num_classes, num_features,
                hidden_dim, spatial_hw):
    T, C, F_, H = num_segments, num_classes, num_features, hidden_dim
    L = len(params['enc1'])
    scale = 1.0 / math.sqrt(H)

    # expansion: W_eff folds the average pool; bias folds PE projection + b_exp
    w_cat = jnp.transpose(params['w_exp'], (2, 0, 1)).reshape(F_, C * H)
    w_eff = jnp.repeat(w_cat, spatial_hw, axis=0) / float(spatial_hw)   # (F*HW, C*H)
    bias = params['pe'] @ w_cat + params['b_exp'].reshape(1, C * H)     # (T, C*H)

    sig = jax.nn.sigmoid(params['alpha'])                               # (L,)
    ones_h = jnp.ones((H,), jnp.float32)

    wqkv_list, waux_list, vec_list = [], [], []
    for l in range(L):
        branch_qkv = []
        for p, gate in ((params['enc1'][l], sig[l]),
                        (params['enc2'][l], 1.0 - sig[l])):
            branch_qkv.append(jnp.concatenate(
                [p['wq'].T * scale, p['wk'].T, p['wv'].T], axis=1))     # (H, 3H)
            waux_list.extend([p['wo'].T, p['w1'].T, p['w2'].T])         # 3 x (H, H)
            vec_list.append(jnp.stack(
                [p['bq'][0] * scale, p['bk'][0], p['bv'][0], p['bo'][0],
                 p['b1'][0], p['b2'][0], p['g1'][0], p['be1'][0],
                 p['g2'][0], p['be2'][0], gate * ones_h], axis=0))      # (11, H)
        wqkv_list.append(jnp.concatenate(branch_qkv, axis=1))           # (H, 6H)

    # attention-group masks over class-major tokens n = c*T + t
    n = C * T
    tok = jnp.arange(n)
    c_id, t_id = tok // T, tok % T
    neg = jnp.float32(-1e9)
    mask_same_c = jnp.where(c_id[:, None] == c_id[None, :], 0.0, neg)
    mask_same_t = jnp.where(t_id[:, None] == t_id[None, :], 0.0, neg)

    return dict(
        w_eff=w_eff.astype(jnp.float32),
        bias=bias.astype(jnp.float32),
        w_qkv=jnp.stack(wqkv_list).astype(jnp.float32),       # (L, H, 6H)
        w_aux=jnp.stack(waux_list).astype(jnp.float32),       # (6L, H, H)
        vecs=jnp.stack(vec_list).astype(jnp.float32),         # (2L, 11, H)
        masks=jnp.stack([mask_same_c, mask_same_t]).astype(jnp.float32),  # (2,N,N)
        w_cls=params['w_cls'].astype(jnp.float32),            # (C, H)
        b_cls=params['b_cls'].reshape(C, 1).astype(jnp.float32),
    )


# =============================================================================
# Deterministic synthetic parameters (mirrors the PyTorch module's structure).
# =============================================================================
def init_params(key, *, num_segments, num_classes, num_features, hidden_dim,
                num_layers):
    T, C, F_, H = num_segments, num_classes, num_features, hidden_dim
    keys = iter(jax.random.split(key, 256))

    def w(shape, scale):
        return jax.random.normal(next(keys), shape, jnp.float32) * scale

    pos = jnp.arange(T, dtype=jnp.float32)[:, None]
    div = jnp.exp(jnp.arange(0, F_, 2, dtype=jnp.float32)
                  * (-math.log(10000.0) / F_))
    pe = jnp.zeros((T, F_), jnp.float32)
    pe = pe.at[:, 0::2].set(jnp.sin(pos * div))
    pe = pe.at[:, 1::2].set(jnp.cos(pos * div))

    def enc_params():
        s = 1.0 / math.sqrt(H)
        return {
            'wq': w((H, H), s), 'bq': w((1, H), 0.01),
            'wk': w((H, H), s), 'bk': w((1, H), 0.01),
            'wv': w((H, H), s), 'bv': w((1, H), 0.01),
            'wo': w((H, H), s), 'bo': w((1, H), 0.01),
            'w1': w((H, H), s), 'b1': w((1, H), 0.01),   # dim_feedforward == H
            'w2': w((H, H), s), 'b2': w((1, H), 0.01),
            'g1': jnp.ones((1, H), jnp.float32), 'be1': jnp.zeros((1, H), jnp.float32),
            'g2': jnp.ones((1, H), jnp.float32), 'be2': jnp.zeros((1, H), jnp.float32),
        }

    return {
        'pe': pe,
        'w_exp': w((C, H, F_), 1.0 / math.sqrt(F_)),      # per-class Linear(F, H)
        'b_exp': w((C, 1, H), 0.01),
        'alpha': jnp.zeros((num_layers,), jnp.float32),
        'w_cls': w((C, H), 1.0 / math.sqrt(H)),           # per-class Linear(H, 1)
        'b_cls': w((1, C), 0.01),
        'enc1': [enc_params() for _ in range(num_layers)],
        'enc2': [enc_params() for _ in range(num_layers)],
    }


# =============================================================================
# Pure-JAX reference (direct transcription of the PyTorch forward) for checking.
# =============================================================================
def reference_forward(x, params, *, num_segments, num_classes, num_features,
                      hidden_dim, num_layers):
    nt, chw = x.shape
    T, C, H, F_ = num_segments, num_classes, hidden_dim, num_features
    hw = chw // F_
    B = nt // T
    pooled = x.reshape(nt, F_, hw).mean(-1).reshape(B, T, F_)
    feats = pooled + params['pe'][None]
    expanded = [jax.nn.relu(feats @ params['w_exp'][c].T + params['b_exp'][c, 0])
                for c in range(C)]
    features = jnp.stack(expanded, axis=0).transpose(1, 2, 0, 3)     # (B, T, C, H)

    def layer_norm(z, g, b):
        mu = z.mean(-1, keepdims=True)
        var = ((z - mu) ** 2).mean(-1, keepdims=True)
        return (z - mu) / jnp.sqrt(var + 1e-5) * g + b

    def encoder(src, p):
        def lin(z, wm, bm):
            return z @ wm.T + bm[0]
        q = lin(src, p['wq'], p['bq']).transpose(0, 2, 1, 3)
        k = lin(src, p['wk'], p['bk']).transpose(0, 2, 1, 3)
        v = lin(src, p['wv'], p['bv']).transpose(0, 2, 1, 3)
        scores = q @ jnp.swapaxes(k, -1, -2) / math.sqrt(H)
        att = jax.nn.softmax(scores, axis=-1) @ v
        out = jax.nn.relu(lin(att, p['wo'], p['bo'])).transpose(0, 2, 1, 3)
        src = layer_norm(src + out, p['g1'][0], p['be1'][0])
        ff = lin(jax.nn.relu(lin(src, p['w1'], p['b1'])), p['w2'], p['b2'])
        return layer_norm(src + ff, p['g2'][0], p['be2'][0])

    for i in range(num_layers):
        eo1 = encoder(features, params['enc1'][i])
        eo2 = jnp.swapaxes(
            encoder(jnp.swapaxes(features, 1, 2), params['enc2'][i]), 1, 2)
        s = jax.nn.sigmoid(params['alpha'][i])
        features = s * eo1 + (1 - s) * eo2
    logits = jnp.einsum('btch,ch->btc', features, params['w_cls']) + params['b_cls'][0]
    return logits.max(axis=1)


if __name__ == "__main__":
    # batch=2, num_segments=8, num_classes=4, num_features=16, spatial h=4,
    # hidden_dim=32, num_layers=1   ->  module input (B*T, F*h*h) = (16, 256)
    B, T, C, F_, H, h = 2, 8, 4, 16, 32, 4
    num_layers = 1

    x = jax.random.normal(jax.random.PRNGKey(0), (B * T, F_ * h * h), jnp.float32)
    params = init_params(jax.random.PRNGKey(42), num_segments=T, num_classes=C,
                         num_features=F_, hidden_dim=H, num_layers=num_layers)
    packed = pack_params(params, num_segments=T, num_classes=C, num_features=F_,
                         hidden_dim=H, spatial_hw=h * h)

    fwd = jax.jit(functools.partial(
        video_transformer_forward, num_segments=T, num_classes=C,
        num_features=F_, hidden_dim=H, num_layers=num_layers))
    out = jax.block_until_ready(fwd(x, packed))

    assert out.shape == (B, C), out.shape
    assert bool(jnp.all(jnp.isfinite(out)))

    ref = reference_forward(x, params, num_segments=T, num_classes=C,
                            num_features=F_, hidden_dim=H, num_layers=num_layers)
    assert bool(jnp.allclose(out, ref, rtol=5e-2, atol=5e-2))

    print("KERNEL_OK")
</pallas_src>

<mosaic_0001>
module attributes {stable_mosaic.version = 11 : i64} {
  func.func @fused_forward_kernel(%arg0: i32, %arg1: memref<1x8x256xf32, #tpu.memory_space<vmem>>, %arg2: memref<256x128xf32, #tpu.memory_space<vmem>>, %arg3: memref<8x128xf32, #tpu.memory_space<vmem>>, %arg4: memref<1x32x192xf32, #tpu.memory_space<vmem>>, %arg5: memref<6x32x32xf32, #tpu.memory_space<vmem>>, %arg6: memref<2x11x32xf32, #tpu.memory_space<vmem>>, %arg7: memref<2x32x32xf32, #tpu.memory_space<vmem>>, %arg8: memref<4x32xf32, #tpu.memory_space<vmem>>, %arg9: memref<4x1xf32, #tpu.memory_space<vmem>>, %arg10: memref<1x1x4xf32, #tpu.memory_space<vmem>>) attributes {dimension_semantics = [#tpu.dimension_semantics<parallel>], iteration_bounds = array<i64: 2>, scalar_prefetch = 0 : i64, scratch_operands = 0 : i64, tpu.core_type = #tpu.core_type<tc>, window_params = [{transform_indices = @transform_0, window_bounds = array<i64: 1, 8, 256>}, {pipeline_mode = #tpu.pipeline_mode<synchronous>, transform_indices = @transform_1, window_bounds = array<i64: 256, 128>}, {pipeline_mode = #tpu.pipeline_mode<synchronous>, transform_indices = @transform_2, window_bounds = array<i64: 8, 128>}, {pipeline_mode = #tpu.pipeline_mode<synchronous>, transform_indices = @transform_3, window_bounds = array<i64: 1, 32, 192>}, {pipeline_mode = #tpu.pipeline_mode<synchronous>, transform_indices = @transform_4, window_bounds = array<i64: 6, 32, 32>}, {pipeline_mode = #tpu.pipeline_mode<synchronous>, transform_indices = @transform_5, window_bounds = array<i64: 2, 11, 32>}, {pipeline_mode = #tpu.pipeline_mode<synchronous>, transform_indices = @transform_6, window_bounds = array<i64: 2, 32, 32>}, {pipeline_mode = #tpu.pipeline_mode<synchronous>, transform_indices = @transform_7, window_bounds = array<i64: 4, 32>}, {pipeline_mode = #tpu.pipeline_mode<synchronous>, transform_indices = @transform_8, window_bounds = array<i64: 4, 1>}, {transform_indices = @transform_9, window_bounds = array<i64: 1, 1, 4>}]} {
    %c0 = arith.constant 0 : index
    %c0_0 = arith.constant 0 : index
    %c0_1 = arith.constant 0 : index
    %0 = vector.load %arg1[%c0, %c0_0, %c0_1] : memref<1x8x256xf32, #tpu.memory_space<vmem>>, vector<1x8x256xf32>
    %1 = vector.shape_cast %0 : vector<1x8x256xf32> to vector<8x256xf32>
    %c0_2 = arith.constant 0 : index
    %c0_3 = arith.constant 0 : index
    %2 = vector.load %arg2[%c0_2, %c0_3] : memref<256x128xf32, #tpu.memory_space<vmem>>, vector<256x128xf32>
    %cst = arith.constant dense<0.000000e+00> : vector<8x128xf32>
    %3 = tpu.matmul %1, %2, %cst {dimension_numbers = #tpu.dot_dimension_numbers<[1], [0], [0], [1], [0, 0, 1, 1], [], []>} : vector<8x256xf32>, vector<256x128xf32>, vector<8x128xf32> -> vector<8x128xf32>
    %c0_4 = arith.constant 0 : index
    %c0_5 = arith.constant 0 : index
    %4 = vector.load %arg3[%c0_4, %c0_5] : memref<8x128xf32, #tpu.memory_space<vmem>>, vector<8x128xf32>
    %5 = arith.addf %3, %4 : vector<8x128xf32>
    %cst_6 = arith.constant 0.000000e+00 : f32
    %6 = vector.broadcast %cst_6 : f32 to vector<8x128xf32>
    %7 = arith.maximumf %5, %6 : vector<8x128xf32>
    %8 = vector.extract_strided_slice %7 {offsets = [0, 0], sizes = [8, 32], strides = [1, 1]} : vector<8x128xf32> to vector<8x32xf32>
    %9 = vector.extract_strided_slice %7 {offsets = [0, 32], sizes = [8, 32], strides = [1, 1]} : vector<8x128xf32> to vector<8x32xf32>
    %10 = vector.extract_strided_slice %7 {offsets = [0, 64], sizes = [8, 32], strides = [1, 1]} : vector<8x128xf32> to vector<8x32xf32>
    %11 = vector.extract_strided_slice %7 {offsets = [0, 96], sizes = [8, 32], strides = [1, 1]} : vector<8x128xf32> to vector<8x32xf32>
    %12 = tpu.concatenate %8, %9, %10, %11 in 0 : vector<8x32xf32>, vector<8x32xf32>, vector<8x32xf32>, vector<8x32xf32> -> vector<32x32xf32>
    %c0_7 = arith.constant 0 : index
    %c0_8 = arith.constant 0 : index
    %c0_9 = arith.constant 0 : index
    %13 = vector.load %arg7[%c0_7, %c0_8, %c0_9] : memref<2x32x32xf32, #tpu.memory_space<vmem>>, vector<1x32x32xf32>
    %14 = vector.shape_cast %13 : vector<1x32x32xf32> to vector<32x32xf32>
    %c1 = arith.constant 1 : index
    %c0_10 = arith.constant 0 : index
    %c0_11 = arith.constant 0 : index
    %15 = vector.load %arg7[%c1, %c0_10, %c0_11] : memref<2x32x32xf32, #tpu.memory_space<vmem>>, vector<1x32x32xf32>
    %16 = vector.shape_cast %15 : vector<1x32x32xf32> to vector<32x32xf32>
    %c0_12 = arith.constant 0 : index
    %c0_13 = arith.constant 0 : index
    %c0_14 = arith.constant 0 : index
    %17 = vector.load %arg4[%c0_12, %c0_13, %c0_14] : memref<1x32x192xf32, #tpu.memory_space<vmem>>, vector<1x32x192xf32>
    %18 = vector.shape_cast %17 : vector<1x32x192xf32> to vector<32x192xf32>
    %cst_15 = arith.constant dense<0.000000e+00> : vector<32x192xf32>
    %19 = tpu.matmul %12, %18, %cst_15 {dimension_numbers = #tpu.dot_dimension_numbers<[1], [0], [0], [1], [0, 0, 1, 1], [], []>} : vector<32x32xf32>, vector<32x192xf32>, vector<32x192xf32> -> vector<32x192xf32>
    %20 = vector.extract_strided_slice %19 {offsets = [0, 0], sizes = [32, 96], strides = [1, 1]} : vector<32x192xf32> to vector<32x96xf32>
    %21 = vector.extract_strided_slice %20 {offsets = [0, 0], sizes = [32, 32], strides = [1, 1]} : vector<32x96xf32> to vector<32x32xf32>
    %c0_16 = arith.constant 0 : index
    %c0_17 = arith.constant 0 : index
    %c0_18 = arith.constant 0 : index
    %22 = vector.load %arg6[%c0_16, %c0_17, %c0_18] : memref<2x11x32xf32, #tpu.memory_space<vmem>>, vector<1x1x32xf32>
    %23 = vector.shape_cast %22 : vector<1x1x32xf32> to vector<32xf32>
    %24 = vector.shape_cast %23 : vector<32xf32> to vector<1x32xf32>
    %25 = vector.broadcast %24 : vector<1x32xf32> to vector<32x32xf32>
    %26 = arith.addf %21, %25 : vector<32x32xf32>
    %27 = vector.extract_strided_slice %20 {offsets = [0, 32], sizes = [32, 32], strides = [1, 1]} : vector<32x96xf32> to vector<32x32xf32>
    %c0_19 = arith.constant 0 : index
    %c1_20 = arith.constant 1 : index
    %c0_21 = arith.constant 0 : index
    %28 = vector.load %arg6[%c0_19, %c1_20, %c0_21] : memref<2x11x32xf32, #tpu.memory_space<vmem>>, vector<1x1x32xf32>
    %29 = vector.shape_cast %28 : vector<1x1x32xf32> to vector<32xf32>
    %30 = vector.shape_cast %29 : vector<32xf32> to vector<1x32xf32>
    %31 = vector.broadcast %30 : vector<1x32xf32> to vector<32x32xf32>
    %32 = arith.addf %27, %31 : vector<32x32xf32>
    %33 = vector.extract_strided_slice %20 {offsets = [0, 64], sizes = [32, 32], strides = [1, 1]} : vector<32x96xf32> to vector<32x32xf32>
    %c0_22 = arith.constant 0 : index
    %c2 = arith.constant 2 : index
    %c0_23 = arith.constant 0 : index
    %34 = vector.load %arg6[%c0_22, %c2, %c0_23] : memref<2x11x32xf32, #tpu.memory_space<vmem>>, vector<1x1x32xf32>
    %35 = vector.shape_cast %34 : vector<1x1x32xf32> to vector<32xf32>
    %36 = vector.shape_cast %35 : vector<32xf32> to vector<1x32xf32>
    %37 = vector.broadcast %36 : vector<1x32xf32> to vector<32x32xf32>
    %38 = arith.addf %33, %37 : vector<32x32xf32>
    %cst_24 = arith.constant dense<0.000000e+00> : vector<32x32xf32>
    %39 = tpu.matmul %26, %32, %cst_24 {dimension_numbers = #tpu.dot_dimension_numbers<[1], [1], [0], [0], [0, 0, 1, 0], [], []>} : vector<32x32xf32>, vector<32x32xf32>, vector<32x32xf32> -> vector<32x32xf32>
    %40 = arith.addf %39, %14 : vector<32x32xf32>
    %cst_25 = arith.constant dense<0xFF800000> : vector<32xf32>
    %41 = vector.multi_reduction <maximumf>, %40, %cst_25 [1] : vector<32x32xf32> to vector<32xf32>
    %42 = vector.shape_cast %41 : vector<32xf32> to vector<32x1xf32>
    %43 = vector.broadcast %42 : vector<32x1xf32> to vector<32x32xf32>
    %44 = arith.subf %40, %43 : vector<32x32xf32>
    %45 = math.exp %44 : vector<32x32xf32>
    %cst_26 = arith.constant dense<0.000000e+00> : vector<32xf32>
    %46 = vector.multi_reduction <add>, %45, %cst_26 [1] : vector<32x32xf32> to vector<32xf32>
    %47 = vector.shape_cast %46 : vector<32xf32> to vector<32x1xf32>
    %48 = tpu.reciprocal %47 {approx = true} : vector<32x1xf32> -> vector<32x1xf32>
    %49 = vector.broadcast %48 : vector<32x1xf32> to vector<32x32xf32>
    %50 = arith.mulf %45, %49 : vector<32x32xf32>
    %cst_27 = arith.constant dense<0.000000e+00> : vector<32x32xf32>
    %51 = tpu.matmul %50, %38, %cst_27 {dimension_numbers = #tpu.dot_dimension_numbers<[1], [0], [0], [1], [0, 0, 1, 1], [], []>} : vector<32x32xf32>, vector<32x32xf32>, vector<32x32xf32> -> vector<32x32xf32>
    %c0_28 = arith.constant 0 : index
    %c0_29 = arith.constant 0 : index
    %c0_30 = arith.constant 0 : index
    %52 = vector.load %arg5[%c0_28, %c0_29, %c0_30] : memref<6x32x32xf32, #tpu.memory_space<vmem>>, vector<1x32x32xf32>
    %53 = vector.shape_cast %52 : vector<1x32x32xf32> to vector<32x32xf32>
    %cst_31 = arith.constant dense<0.000000e+00> : vector<32x32xf32>
    %54 = tpu.matmul %51, %53, %cst_31 {dimension_numbers = #tpu.dot_dimension_numbers<[1], [0], [0], [1], [0, 0, 1, 1], [], []>} : vector<32x32xf32>, vector<32x32xf32>, vector<32x32xf32> -> vector<32x32xf32>
    %c0_32 = arith.constant 0 : index
    %c3 = arith.constant 3 : index
    %c0_33 = arith.constant 0 : index
    %55 = vector.load %arg6[%c0_32, %c3, %c0_33] : memref<2x11x32xf32, #tpu.memory_space<vmem>>, vector<1x1x32xf32>
    %56 = vector.shape_cast %55 : vector<1x1x32xf32> to vector<32xf32>
    %57 = vector.shape_cast %56 : vector<32xf32> to vector<1x32xf32>
    %58 = vector.broadcast %57 : vector<1x32xf32> to vector<32x32xf32>
    %59 = arith.addf %54, %58 : vector<32x32xf32>
    %cst_34 = arith.constant 0.000000e+00 : f32
    %60 = vector.broadcast %cst_34 : f32 to vector<32x32xf32>
    %61 = arith.maximumf %59, %60 : vector<32x32xf32>
    %62 = arith.addf %12, %61 : vector<32x32xf32>
    %c0_35 = arith.constant 0 : index
    %c6 = arith.constant 6 : index
    %c0_36 = arith.constant 0 : index
    %63 = vector.load %arg6[%c0_35, %c6, %c0_36] : memref<2x11x32xf32, #tpu.memory_space<vmem>>, vector<1x1x32xf32>
    %64 = vector.shape_cast %63 : vector<1x1x32xf32> to vector<32xf32>
    %c0_37 = arith.constant 0 : index
    %c7 = arith.constant 7 : index
    %c0_38 = arith.constant 0 : index
    %65 = vector.load %arg6[%c0_37, %c7, %c0_38] : memref<2x11x32xf32, #tpu.memory_space<vmem>>, vector<1x1x32xf32>
    %66 = vector.shape_cast %65 : vector<1x1x32xf32> to vector<32xf32>
    %cst_39 = arith.constant dense<0.000000e+00> : vector<32xf32>
    %67 = vector.multi_reduction <add>, %62, %cst_39 [1] : vector<32x32xf32> to vector<32xf32>
    %68 = vector.shape_cast %67 : vector<32xf32> to vector<32x1xf32>
    %cst_40 = arith.constant 3.200000e+01 : f32
    %69 = vector.broadcast %cst_40 : f32 to vector<32x1xf32>
    %70 = arith.divf %68, %69 : vector<32x1xf32>
    %71 = vector.broadcast %70 : vector<32x1xf32> to vector<32x32xf32>
    %72 = arith.subf %62, %71 : vector<32x32xf32>
    %73 = arith.mulf %72, %72 : vector<32x32xf32>
    %cst_41 = arith.constant dense<0.000000e+00> : vector<32xf32>
    %74 = vector.multi_reduction <add>, %73, %cst_41 [1] : vector<32x32xf32> to vector<32xf32>
    %75 = vector.shape_cast %74 : vector<32xf32> to vector<32x1xf32>
    %cst_42 = arith.constant 3.200000e+01 : f32
    %76 = vector.broadcast %cst_42 : f32 to vector<32x1xf32>
    %77 = arith.divf %75, %76 : vector<32x1xf32>
    %78 = vector.broadcast %70 : vector<32x1xf32> to vector<32x32xf32>
    %79 = arith.subf %62, %78 : vector<32x32xf32>
    %cst_43 = arith.constant 9.99999974E-6 : f32
    %80 = vector.broadcast %cst_43 : f32 to vector<32x1xf32>
    %81 = arith.addf %77, %80 : vector<32x1xf32>
    %82 = math.rsqrt %81 : vector<32x1xf32>
    %83 = vector.broadcast %82 : vector<32x1xf32> to vector<32x32xf32>
    %84 = arith.mulf %79, %83 : vector<32x32xf32>
    %85 = vector.shape_cast %64 : vector<32xf32> to vector<1x32xf32>
    %86 = vector.broadcast %85 : vector<1x32xf32> to vector<32x32xf32>
    %87 = arith.mulf %84, %86 : vector<32x32xf32>
    %88 = vector.shape_cast %66 : vector<32xf32> to vector<1x32xf32>
    %89 = vector.broadcast %88 : vector<1x32xf32> to vector<32x32xf32>
    %90 = arith.addf %87, %89 : vector<32x32xf32>
    %c1_44 = arith.constant 1 : index
    %c0_45 = arith.constant 0 : index
    %c0_46 = arith.constant 0 : index
    %91 = vector.load %arg5[%c1_44, %c0_45, %c0_46] : memref<6x32x32xf32, #tpu.memory_space<vmem>>, vector<1x32x32xf32>
    %92 = vector.shape_cast %91 : vector<1x32x32xf32> to vector<32x32xf32>
    %cst_47 = arith.constant dense<0.000000e+00> : vector<32x32xf32>
    %93 = tpu.matmul %90, %92, %cst_47 {dimension_numbers = #tpu.dot_dimension_numbers<[1], [0], [0], [1], [0, 0, 1, 1], [], []>} : vector<32x32xf32>, vector<32x32xf32>, vector<32x32xf32> -> vector<32x32xf32>
    %c0_48 = arith.constant 0 : index
    %c4 = arith.constant 4 : index
    %c0_49 = arith.constant 0 : index
    %94 = vector.load %arg6[%c0_48, %c4, %c0_49] : memref<2x11x32xf32, #tpu.memory_space<vmem>>, vector<1x1x32xf32>
    %95 = vector.shape_cast %94 : vector<1x1x32xf32> to vector<32xf32>
    %96 = vector.shape_cast %95 : vector<32xf32> to vector<1x32xf32>
    %97 = vector.broadcast %96 : vector<1x32xf32> to vector<32x32xf32>
    %98 = arith.addf %93, %97 : vector<32x32xf32>
    %cst_50 = arith.constant 0.000000e+00 : f32
    %99 = vector.broadcast %cst_50 : f32 to vector<32x32xf32>
    %100 = arith.maximumf %98, %99 : vector<32x32xf32>
    %c2_51 = arith.constant 2 : index
    %c0_52 = arith.constant 0 : index
    %c0_53 = arith.constant 0 : index
    %101 = vector.load %arg5[%c2_51, %c0_52, %c0_53] : memref<6x32x32xf32, #tpu.memory_space<vmem>>, vector<1x32x32xf32>
    %102 = vector.shape_cast %101 : vector<1x32x32xf32> to vector<32x32xf32>
    %cst_54 = arith.constant dense<0.000000e+00> : vector<32x32xf32>
    %103 = tpu.matmul %100, %102, %cst_54 {dimension_numbers = #tpu.dot_dimension_numbers<[1], [0], [0], [1], [0, 0, 1, 1], [], []>} : vector<32x32xf32>, vector<32x32xf32>, vector<32x32xf32> -> vector<32x32xf32>
    %c0_55 = arith.constant 0 : index
    %c5 = arith.constant 5 : index
    %c0_56 = arith.constant 0 : index
    %104 = vector.load %arg6[%c0_55, %c5, %c0_56] : memref<2x11x32xf32, #tpu.memory_space<vmem>>, vector<1x1x32xf32>
    %105 = vector.shape_cast %104 : vector<1x1x32xf32> to vector<32xf32>
    %106 = vector.shape_cast %105 : vector<32xf32> to vector<1x32xf32>
    %107 = vector.broadcast %106 : vector<1x32xf32> to vector<32x32xf32>
    %108 = arith.addf %103, %107 : vector<32x32xf32>
    %109 = arith.addf %90, %108 : vector<32x32xf32>
    %c0_57 = arith.constant 0 : index
    %c8 = arith.constant 8 : index
    %c0_58 = arith.constant 0 : index
    %110 = vector.load %arg6[%c0_57, %c8, %c0_58] : memref<2x11x32xf32, #tpu.memory_space<vmem>>, vector<1x1x32xf32>
    %111 = vector.shape_cast %110 : vector<1x1x32xf32> to vector<32xf32>
    %c0_59 = arith.constant 0 : index
    %c9 = arith.constant 9 : index
    %c0_60 = arith.constant 0 : index
    %112 = vector.load %arg6[%c0_59, %c9, %c0_60] : memref<2x11x32xf32, #tpu.memory_space<vmem>>, vector<1x1x32xf32>
    %113 = vector.shape_cast %112 : vector<1x1x32xf32> to vector<32xf32>
    %cst_61 = arith.constant dense<0.000000e+00> : vector<32xf32>
    %114 = vector.multi_reduction <add>, %109, %cst_61 [1] : vector<32x32xf32> to vector<32xf32>
    %115 = vector.shape_cast %114 : vector<32xf32> to vector<32x1xf32>
    %cst_62 = arith.constant 3.200000e+01 : f32
    %116 = vector.broadcast %cst_62 : f32 to vector<32x1xf32>
    %117 = arith.divf %115, %116 : vector<32x1xf32>
    %118 = vector.broadcast %117 : vector<32x1xf32> to vector<32x32xf32>
    %119 = arith.subf %109, %118 : vector<32x32xf32>
    %120 = arith.mulf %119, %119 : vector<32x32xf32>
    %cst_63 = arith.constant dense<0.000000e+00> : vector<32xf32>
    %121 = vector.multi_reduction <add>, %120, %cst_63 [1] : vector<32x32xf32> to vector<32xf32>
    %122 = vector.shape_cast %121 : vector<32xf32> to vector<32x1xf32>
    %cst_64 = arith.constant 3.200000e+01 : f32
    %123 = vector.broadcast %cst_64 : f32 to vector<32x1xf32>
    %124 = arith.divf %122, %123 : vector<32x1xf32>
    %125 = vector.broadcast %117 : vector<32x1xf32> to vector<32x32xf32>
    %126 = arith.subf %109, %125 : vector<32x32xf32>
    %cst_65 = arith.constant 9.99999974E-6 : f32
    %127 = vector.broadcast %cst_65 : f32 to vector<32x1xf32>
    %128 = arith.addf %124, %127 : vector<32x1xf32>
    %129 = math.rsqrt %128 : vector<32x1xf32>
    %130 = vector.broadcast %129 : vector<32x1xf32> to vector<32x32xf32>
    %131 = arith.mulf %126, %130 : vector<32x32xf32>
    %132 = vector.shape_cast %111 : vector<32xf32> to vector<1x32xf32>
    %133 = vector.broadcast %132 : vector<1x32xf32> to vector<32x32xf32>
    %134 = arith.mulf %131, %133 : vector<32x32xf32>
    %135 = vector.shape_cast %113 : vector<32xf32> to vector<1x32xf32>
    %136 = vector.broadcast %135 : vector<1x32xf32> to vector<32x32xf32>
    %137 = arith.addf %134, %136 : vector<32x32xf32>
    %138 = vector.extract_strided_slice %19 {offsets = [0, 96], sizes = [32, 96], strides = [1, 1]} : vector<32x192xf32> to vector<32x96xf32>
    %139 = vector.extract_strided_slice %138 {offsets = [0, 0], sizes = [32, 32], strides = [1, 1]} : vector<32x96xf32> to vector<32x32xf32>
    %c1_66 = arith.constant 1 : index
    %c0_67 = arith.constant 0 : index
    %c0_68 = arith.constant 0 : index
    %140 = vector.load %arg6[%c1_66, %c0_67, %c0_68] : memref<2x11x32xf32, #tpu.memory_space<vmem>>, vector<1x1x32xf32>
    %141 = vector.shape_cast %140 : vector<1x1x32xf32> to vector<32xf32>
    %142 = vector.shape_cast %141 : vector<32xf32> to vector<1x32xf32>
    %143 = vector.broadcast %142 : vector<1x32xf32> to vector<32x32xf32>
    %144 = arith.addf %139, %143 : vector<32x32xf32>
    %145 = vector.extract_strided_slice %138 {offsets = [0, 32], sizes = [32, 32], strides = [1, 1]} : vector<32x96xf32> to vector<32x32xf32>
    %c1_69 = arith.constant 1 : index
    %c1_70 = arith.constant 1 : index
    %c0_71 = arith.constant 0 : index
    %146 = vector.load %arg6[%c1_69, %c1_70, %c0_71] : memref<2x11x32xf32, #tpu.memory_space<vmem>>, vector<1x1x32xf32>
    %147 = vector.shape_cast %146 : vector<1x1x32xf32> to vector<32xf32>
    %148 = vector.shape_cast %147 : vector<32xf32> to vector<1x32xf32>
    %149 = vector.broadcast %148 : vector<1x32xf32> to vector<32x32xf32>
    %150 = arith.addf %145, %149 : vector<32x32xf32>
    %151 = vector.extract_strided_slice %138 {offsets = [0, 64], sizes = [32, 32], strides = [1, 1]} : vector<32x96xf32> to vector<32x32xf32>
    %c1_72 = arith.constant 1 : index
    %c2_73 = arith.constant 2 : index
    %c0_74 = arith.constant 0 : index
    %152 = vector.load %arg6[%c1_72, %c2_73, %c0_74] : memref<2x11x32xf32, #tpu.memory_space<vmem>>, vector<1x1x32xf32>
    %153 = vector.shape_cast %152 : vector<1x1x32xf32> to vector<32xf32>
    %154 = vector.shape_cast %153 : vector<32xf32> to vector<1x32xf32>
    %155 = vector.broadcast %154 : vector<1x32xf32> to vector<32x32xf32>
    %156 = arith.addf %151, %155 : vector<32x32xf32>
    %cst_75 = arith.constant dense<0.000000e+00> : vector<32x32xf32>
    %157 = tpu.matmul %144, %150, %cst_75 {dimension_numbers = #tpu.dot_dimension_numbers<[1], [1], [0], [0], [0, 0, 1, 0], [], []>} : vector<32x32xf32>, vector<32x32xf32>, vector<32x32xf32> -> vector<32x32xf32>
    %158 = arith.addf %157, %16 : vector<32x32xf32>
    %cst_76 = arith.constant dense<0xFF800000> : vector<32xf32>
    %159 = vector.multi_reduction <maximumf>, %158, %cst_76 [1] : vector<32x32xf32> to vector<32xf32>
    %160 = vector.shape_cast %159 : vector<32xf32> to vector<32x1xf32>
    %161 = vector.broadcast %160 : vector<32x1xf32> to vector<32x32xf32>
    %162 = arith.subf %158, %161 : vector<32x32xf32>
    %163 = math.exp %162 : vector<32x32xf32>
    %cst_77 = arith.constant dense<0.000000e+00> : vector<32xf32>
    %164 = vector.multi_reduction <add>, %163, %cst_77 [1] : vector<32x32xf32> to vector<32xf32>
    %165 = vector.shape_cast %164 : vector<32xf32> to vector<32x1xf32>
    %166 = tpu.reciprocal %165 {approx = true} : vector<32x1xf32> -> vector<32x1xf32>
    %167 = vector.broadcast %166 : vector<32x1xf32> to vector<32x32xf32>
    %168 = arith.mulf %163, %167 : vector<32x32xf32>
    %cst_78 = arith.constant dense<0.000000e+00> : vector<32x32xf32>
    %169 = tpu.matmul %168, %156, %cst_78 {dimension_numbers = #tpu.dot_dimension_numbers<[1], [0], [0], [1], [0, 0, 1, 1], [], []>} : vector<32x32xf32>, vector<32x32xf32>, vector<32x32xf32> -> vector<32x32xf32>
    %c3_79 = arith.constant 3 : index
    %c0_80 = arith.constant 0 : index
    %c0_81 = arith.constant 0 : index
    %170 = vector.load %arg5[%c3_79, %c0_80, %c0_81] : memref<6x32x32xf32, #tpu.memory_space<vmem>>, vector<1x32x32xf32>
    %171 = vector.shape_cast %170 : vector<1x32x32xf32> to vector<32x32xf32>
    %cst_82 = arith.constant dense<0.000000e+00> : vector<32x32xf32>
    %172 = tpu.matmul %169, %171, %cst_82 {dimension_numbers = #tpu.dot_dimension_numbers<[1], [0], [0], [1], [0, 0, 1, 1], [], []>} : vector<32x32xf32>, vector<32x32xf32>, vector<32x32xf32> -> vector<32x32xf32>
    %c1_83 = arith.constant 1 : index
    %c3_84 = arith.constant 3 : index
    %c0_85 = arith.constant 0 : index
    %173 = vector.load %arg6[%c1_83, %c3_84, %c0_85] : memref<2x11x32xf32, #tpu.memory_space<vmem>>, vector<1x1x32xf32>
    %174 = vector.shape_cast %173 : vector<1x1x32xf32> to vector<32xf32>
    %175 = vector.shape_cast %174 : vector<32xf32> to vector<1x32xf32>
    %176 = vector.broadcast %175 : vector<1x32xf32> to vector<32x32xf32>
    %177 = arith.addf %172, %176 : vector<32x32xf32>
    %cst_86 = arith.constant 0.000000e+00 : f32
    %178 = vector.broadcast %cst_86 : f32 to vector<32x32xf32>
    %179 = arith.maximumf %177, %178 : vector<32x32xf32>
    %180 = arith.addf %12, %179 : vector<32x32xf32>
    %c1_87 = arith.constant 1 : index
    %c6_88 = arith.constant 6 : index
    %c0_89 = arith.constant 0 : index
    %181 = vector.load %arg6[%c1_87, %c6_88, %c0_89] : memref<2x11x32xf32, #tpu.memory_space<vmem>>, vector<1x1x32xf32>
    %182 = vector.shape_cast %181 : vector<1x1x32xf32> to vector<32xf32>
    %c1_90 = arith.constant 1 : index
    %c7_91 = arith.constant 7 : index
    %c0_92 = arith.constant 0 : index
    %183 = vector.load %arg6[%c1_90, %c7_91, %c0_92] : memref<2x11x32xf32, #tpu.memory_space<vmem>>, vector<1x1x32xf32>
    %184 = vector.shape_cast %183 : vector<1x1x32xf32> to vector<32xf32>
    %cst_93 = arith.constant dense<0.000000e+00> : vector<32xf32>
    %185 = vector.multi_reduction <add>, %180, %cst_93 [1] : vector<32x32xf32> to vector<32xf32>
    %186 = vector.shape_cast %185 : vector<32xf32> to vector<32x1xf32>
    %cst_94 = arith.constant 3.200000e+01 : f32
    %187 = vector.broadcast %cst_94 : f32 to vector<32x1xf32>
    %188 = arith.divf %186, %187 : vector<32x1xf32>
    %189 = vector.broadcast %188 : vector<32x1xf32> to vector<32x32xf32>
    %190 = arith.subf %180, %189 : vector<32x32xf32>
    %191 = arith.mulf %190, %190 : vector<32x32xf32>
    %cst_95 = arith.constant dense<0.000000e+00> : vector<32xf32>
    %192 = vector.multi_reduction <add>, %191, %cst_95 [1] : vector<32x32xf32> to vector<32xf32>
    %193 = vector.shape_cast %192 : vector<32xf32> to vector<32x1xf32>
    %cst_96 = arith.constant 3.200000e+01 : f32
    %194 = vector.broadcast %cst_96 : f32 to vector<32x1xf32>
    %195 = arith.divf %193, %194 : vector<32x1xf32>
    %196 = vector.broadcast %188 : vector<32x1xf32> to vector<32x32xf32>
    %197 = arith.subf %180, %196 : vector<32x32xf32>
    %cst_97 = arith.constant 9.99999974E-6 : f32
    %198 = vector.broadcast %cst_97 : f32 to vector<32x1xf32>
    %199 = arith.addf %195, %198 : vector<32x1xf32>
    %200 = math.rsqrt %199 : vector<32x1xf32>
    %201 = vector.broadcast %200 : vector<32x1xf32> to vector<32x32xf32>
    %202 = arith.mulf %197, %201 : vector<32x32xf32>
    %203 = vector.shape_cast %182 : vector<32xf32> to vector<1x32xf32>
    %204 = vector.broadcast %203 : vector<1x32xf32> to vector<32x32xf32>
    %205 = arith.mulf %202, %204 : vector<32x32xf32>
    %206 = vector.shape_cast %184 : vector<32xf32> to vector<1x32xf32>
    %207 = vector.broadcast %206 : vector<1x32xf32> to vector<32x32xf32>
    %208 = arith.addf %205, %207 : vector<32x32xf32>
    %c4_98 = arith.constant 4 : index
    %c0_99 = arith.constant 0 : index
    %c0_100 = arith.constant 0 : index
    %209 = vector.load %arg5[%c4_98, %c0_99, %c0_100] : memref<6x32x32xf32, #tpu.memory_space<vmem>>, vector<1x32x32xf32>
    %210 = vector.shape_cast %209 : vector<1x32x32xf32> to vector<32x32xf32>
    %cst_101 = arith.constant dense<0.000000e+00> : vector<32x32xf32>
    %211 = tpu.matmul %208, %210, %cst_101 {dimension_numbers = #tpu.dot_dimension_numbers<[1], [0], [0], [1], [0, 0, 1, 1], [], []>} : vector<32x32xf32>, vector<32x32xf32>, vector<32x32xf32> -> vector<32x32xf32>
    %c1_102 = arith.constant 1 : index
    %c4_103 = arith.constant 4 : index
    %c0_104 = arith.constant 0 : index
    %212 = vector.load %arg6[%c1_102, %c4_103, %c0_104] : memref<2x11x32xf32, #tpu.memory_space<vmem>>, vector<1x1x32xf32>
    %213 = vector.shape_cast %212 : vector<1x1x32xf32> to vector<32xf32>
    %214 = vector.shape_cast %213 : vector<32xf32> to vector<1x32xf32>
    %215 = vector.broadcast %214 : vector<1x32xf32> to vector<32x32xf32>
    %216 = arith.addf %211, %215 : vector<32x32xf32>
    %cst_105 = arith.constant 0.000000e+00 : f32
    %217 = vector.broadcast %cst_105 : f32 to vector<32x32xf32>
    %218 = arith.maximumf %216, %217 : vector<32x32xf32>
    %c5_106 = arith.constant 5 : index
    %c0_107 = arith.constant 0 : index
    %c0_108 = arith.constant 0 : index
    %219 = vector.load %arg5[%c5_106, %c0_107, %c0_108] : memref<6x32x32xf32, #tpu.memory_space<vmem>>, vector<1x32x32xf32>
    %220 = vector.shape_cast %219 : vector<1x32x32xf32> to vector<32x32xf32>
    %cst_109 = arith.constant dense<0.000000e+00> : vector<32x32xf32>
    %221 = tpu.matmul %218, %220, %cst_109 {dimension_numbers = #tpu.dot_dimension_numbers<[1], [0], [0], [1], [0, 0, 1, 1], [], []>} : vector<32x32xf32>, vector<32x32xf32>, vector<32x32xf32> -> vector<32x32xf32>
    %c1_110 = arith.constant 1 : index
    %c5_111 = arith.constant 5 : index
    %c0_112 = arith.constant 0 : index
    %222 = vector.load %arg6[%c1_110, %c5_111, %c0_112] : memref<2x11x32xf32, #tpu.memory_space<vmem>>, vector<1x1x32xf32>
    %223 = vector.shape_cast %222 : vector<1x1x32xf32> to vector<32xf32>
    %224 = vector.shape_cast %223 : vector<32xf32> to vector<1x32xf32>
    %225 = vector.broadcast %224 : vector<1x32xf32> to vector<32x32xf32>
    %226 = arith.addf %221, %225 : vector<32x32xf32>
    %227 = arith.addf %208, %226 : vector<32x32xf32>
    %c1_113 = arith.constant 1 : index
    %c8_114 = arith.constant 8 : index
    %c0_115 = arith.constant 0 : index
    %228 = vector.load %arg6[%c1_113, %c8_114, %c0_115] : memref<2x11x32xf32, #tpu.memory_space<vmem>>, vector<1x1x32xf32>
    %229 = vector.shape_cast %228 : vector<1x1x32xf32> to vector<32xf32>
    %c1_116 = arith.constant 1 : index
    %c9_117 = arith.constant 9 : index
    %c0_118 = arith.constant 0 : index
    %230 = vector.load %arg6[%c1_116, %c9_117, %c0_118] : memref<2x11x32xf32, #tpu.memory_space<vmem>>, vector<1x1x32xf32>
    %231 = vector.shape_cast %230 : vector<1x1x32xf32> to vector<32xf32>
    %cst_119 = arith.constant dense<0.000000e+00> : vector<32xf32>
    %232 = vector.multi_reduction <add>, %227, %cst_119 [1] : vector<32x32xf32> to vector<32xf32>
    %233 = vector.shape_cast %232 : vector<32xf32> to vector<32x1xf32>
    %cst_120 = arith.constant 3.200000e+01 : f32
    %234 = vector.broadcast %cst_120 : f32 to vector<32x1xf32>
    %235 = arith.divf %233, %234 : vector<32x1xf32>
    %236 = vector.broadcast %235 : vector<32x1xf32> to vector<32x32xf32>
    %237 = arith.subf %227, %236 : vector<32x32xf32>
    %238 = arith.mulf %237, %237 : vector<32x32xf32>
    %cst_121 = arith.constant dense<0.000000e+00> : vector<32xf32>
    %239 = vector.multi_reduction <add>, %238, %cst_121 [1] : vector<32x32xf32> to vector<32xf32>
    %240 = vector.shape_cast %239 : vector<32xf32> to vector<32x1xf32>
    %cst_122 = arith.constant 3.200000e+01 : f32
    %241 = vector.broadcast %cst_122 : f32 to vector<32x1xf32>
    %242 = arith.divf %240, %241 : vector<32x1xf32>
    %243 = vector.broadcast %235 : vector<32x1xf32> to vector<32x32xf32>
    %244 = arith.subf %227, %243 : vector<32x32xf32>
    %cst_123 = arith.constant 9.99999974E-6 : f32
    %245 = vector.broadcast %cst_123 : f32 to vector<32x1xf32>
    %246 = arith.addf %242, %245 : vector<32x1xf32>
    %247 = math.rsqrt %246 : vector<32x1xf32>
    %248 = vector.broadcast %247 : vector<32x1xf32> to vector<32x32xf32>
    %249 = arith.mulf %244, %248 : vector<32x32xf32>
    %250 = vector.shape_cast %229 : vector<32xf32> to vector<1x32xf32>
    %251 = vector.broadcast %250 : vector<1x32xf32> to vector<32x32xf32>
    %252 = arith.mulf %249, %251 : vector<32x32xf32>
    %253 = vector.shape_cast %231 : vector<32xf32> to vector<1x32xf32>
    %254 = vector.broadcast %253 : vector<1x32xf32> to vector<32x32xf32>
    %255 = arith.addf %252, %254 : vector<32x32xf32>
    %c0_124 = arith.constant 0 : index
    %c10 = arith.constant 10 : index
    %c0_125 = arith.constant 0 : index
    %256 = vector.load %arg6[%c0_124, %c10, %c0_125] : memref<2x11x32xf32, #tpu.memory_space<vmem>>, vector<1x1x32xf32>
    %257 = vector.shape_cast %256 : vector<1x1x32xf32> to vector<32xf32>
    %258 = vector.shape_cast %257 : vector<32xf32> to vector<1x32xf32>
    %259 = vector.broadcast %258 : vector<1x32xf32> to vector<32x32xf32>
    %260 = arith.mulf %137, %259 : vector<32x32xf32>
    %c1_126 = arith.constant 1 : index
    %c10_127 = arith.constant 10 : index
    %c0_128 = arith.constant 0 : index
    %261 = vector.load %arg6[%c1_126, %c10_127, %c0_128] : memref<2x11x32xf32, #tpu.memory_space<vmem>>, vector<1x1x32xf32>
    %262 = vector.shape_cast %261 : vector<1x1x32xf32> to vector<32xf32>
    %263 = vector.shape_cast %262 : vector<32xf32> to vector<1x32xf32>
    %264 = vector.broadcast %263 : vector<1x32xf32> to vector<32x32xf32>
    %265 = arith.mulf %255, %264 : vector<32x32xf32>
    %266 = arith.addf %260, %265 : vector<32x32xf32>
    %267 = vector.shape_cast %266 : vector<32x32xf32> to vector<4x8x32xf32>
    %c0_129 = arith.constant 0 : index
    %c0_130 = arith.constant 0 : index
    %268 = vector.load %arg8[%c0_129, %c0_130] : memref<4x32xf32, #tpu.memory_space<vmem>>, vector<4x32xf32>
    %269 = vector.shape_cast %268 : vector<4x32xf32> to vector<4x1x32xf32>
    %270 = vector.broadcast %269 : vector<4x1x32xf32> to vector<4x8x32xf32>
    %271 = arith.mulf %267, %270 : vector<4x8x32xf32>
    %cst_131 = arith.constant dense<0.000000e+00> : vector<4x8xf32>
    %272 = vector.multi_reduction <add>, %271, %cst_131 [2] : vector<4x8x32xf32> to vector<4x8xf32>
    %c0_132 = arith.constant 0 : index
    %c0_133 = arith.constant 0 : index
    %273 = vector.load %arg9[%c0_132, %c0_133] : memref<4x1xf32, #tpu.memory_space<vmem>>, vector<4x1xf32>
    %274 = vector.broadcast %273 : vector<4x1xf32> to vector<4x8xf32>
    %275 = arith.addf %272, %274 : vector<4x8xf32>
    %cst_134 = arith.constant dense<0xFF800000> : vector<4xf32>
    %276 = vector.multi_reduction <maximumf>, %275, %cst_134 [1] : vector<4x8xf32> to vector<4xf32>
    %c0_135 = arith.constant 0 : index
    %c0_136 = arith.constant 0 : index
    %c0_137 = arith.constant 0 : index
    %277 = vector.load %arg10[%c0_135, %c0_136, %c0_137] : memref<1x1x4xf32, #tpu.memory_space<vmem>>, vector<1x1x4xf32>
    %278 = vector.shape_cast %277 : vector<1x1x4xf32> to vector<4xf32>
    %279 = vector.shape_cast %276 : vector<4xf32> to vector<1x1x4xf32>
    tpu.vector_store %arg10[%c0_135, %c0_136, %c0_137], %279 {strides = array<i32>} : memref<1x1x4xf32, #tpu.memory_space<vmem>>, vector<1x1x4xf32>,
    return
  }
  func.func @transform_0(%arg0: i32) -> (i32, i32, i32) {
    %c0_i32 = arith.constant 0 : i32
    %c0_i32_0 = arith.constant 0 : i32
    %c0_i32_1 = arith.constant 0 : i32
    return %arg0, %c0_i32, %c0_i32_0 : i32, i32, i32
  }
  func.func @transform_1(%arg0: i32) -> (i32, i32) {
    %c0_i32 = arith.constant 0 : i32
    %c0_i32_0 = arith.constant 0 : i32
    %c0_i32_1 = arith.constant 0 : i32
    return %c0_i32, %c0_i32_0 : i32, i32
  }
  func.func @transform_2(%arg0: i32) -> (i32, i32) {
    %c0_i32 = arith.constant 0 : i32
    %c0_i32_0 = arith.constant 0 : i32
    %c0_i32_1 = arith.constant 0 : i32
    return %c0_i32, %c0_i32_0 : i32, i32
  }
  func.func @transform_3(%arg0: i32) -> (i32, i32, i32) {
    %c0_i32 = arith.constant 0 : i32
    %c0_i32_0 = arith.constant 0 : i32
    %c0_i32_1 = arith.constant 0 : i32
    %c0_i32_2 = arith.constant 0 : i32
    return %c0_i32, %c0_i32_0, %c0_i32_1 : i32, i32, i32
  }
  func.func @transform_4(%arg0: i32) -> (i32, i32, i32) {
    %c0_i32 = arith.constant 0 : i32
    %c0_i32_0 = arith.constant 0 : i32
    %c0_i32_1 = arith.constant 0 : i32
    %c0_i32_2 = arith.constant 0 : i32
    return %c0_i32, %c0_i32_0, %c0_i32_1 : i32, i32, i32
  }
  func.func @transform_5(%arg0: i32) -> (i32, i32, i32) {
    %c0_i32 = arith.constant 0 : i32
    %c0_i32_0 = arith.constant 0 : i32
    %c0_i32_1 = arith.constant 0 : i32
    %c0_i32_2 = arith.constant 0 : i32
    return %c0_i32, %c0_i32_0, %c0_i32_1 : i32, i32, i32
  }
  func.func @transform_6(%arg0: i32) -> (i32, i32, i32) {
    %c0_i32 = arith.constant 0 : i32
    %c0_i32_0 = arith.constant 0 : i32
    %c0_i32_1 = arith.constant 0 : i32
    %c0_i32_2 = arith.constant 0 : i32
    return %c0_i32, %c0_i32_0, %c0_i32_1 : i32, i32, i32
  }
  func.func @transform_7(%arg0: i32) -> (i32, i32) {
    %c0_i32 = arith.constant 0 : i32
    %c0_i32_0 = arith.constant 0 : i32
    %c0_i32_1 = arith.constant 0 : i32
    return %c0_i32, %c0_i32_0 : i32, i32
  }
  func.func @transform_8(%arg0: i32) -> (i32, i32) {
    %c0_i32 = arith.constant 0 : i32
    %c0_i32_0 = arith.constant 0 : i32
    %c0_i32_1 = arith.constant 0 : i32
    return %c0_i32, %c0_i32_0 : i32, i32
  }
  func.func @transform_9(%arg0: i32) -> (i32, i32, i32) {
    %c0_i32 = arith.constant 0 : i32
    %c0_i32_0 = arith.constant 0 : i32
    %c0_i32_1 = arith.constant 0 : i32
    return %arg0, %c0_i32, %c0_i32_0 : i32, i32, i32
  }
}

</mosaic_0001>

<llo_original>
// kernel: video_transformer_forward.1
$region0: #{video_transformer_forward.1}
  #allocation0 [shape = 'u32[]', space=smem, size = 0x4, offset = 0x4, fixed_abs, tag = 'smem constant byte address 0x4 - core index']
  #allocation1 [shape = 'u32[72,128]{1,0:T(1,128)}', space=vmem, size = 0x9000, scoped, tag = 'internal scratch']
  %s0 = inlined_call_operand.vmem [shape: f32[2,8,256], index: 0, kind: input, shape index: {}]
  %s1 = inlined_call_operand.hbm [shape: f32[256,128], index: 1, kind: input, shape index: {}]
  %s2 = inlined_call_operand.vmem [shape: f32[8,128], index: 2, kind: input, shape index: {}]
  %s3 = inlined_call_operand.hbm [shape: f32[1,32,192], index: 3, kind: input, shape index: {}]
  %s4 = inlined_call_operand.hbm [shape: f32[6,32,32], index: 4, kind: input, shape index: {}]
  %s5 = inlined_call_operand.vmem [shape: f32[2,11,32], index: 5, kind: input, shape index: {}]
  %s6 = inlined_call_operand.hbm [shape: f32[2,32,32], index: 6, kind: input, shape index: {}]
  %s7 = inlined_call_operand.vmem [shape: f32[4,32], index: 7, kind: input, shape index: {}]
  %s8 = inlined_call_operand.vmem [shape: f32[4,1], index: 8, kind: input, shape index: {}]
  %s9 = inlined_call_operand.hbm [shape: f32[2,1,4], index: 9, kind: output, shape index: {}]
  %s10 = sld [smem:[#allocation0]]
  $region85: #{video_transformer_forward.1} parent=0
    _
  %s12 = ssub.s32 1, %s10
  %s13 = scalar_select 0, %s12, %s10
  $region1: #{video_transformer_forward.1} parent=0
    #allocation2 [shape = 'u8[131072]{0}', space=vmem, size = 0x20000, scoped, tag = 'input window, operand 1, single buffered']
    #allocation3 [shape = 's32[2]{0}', space=sflag, size = 0x8, scoped, tag = 'scoped memory for video_transformer_forward.1']
    #allocation4 [shape = 's32[2]{0}', space=sflag, size = 0x8, scoped, tag = 'scoped memory for video_transformer_forward.1']
    #allocation5 [shape = 'u8[32768]{0}', space=vmem, size = 0x8000, scoped, tag = 'input window, operand 3, single buffered']
    #allocation6 [shape = 's32[1]{0}', space=sflag, size = 0x4, scoped, tag = 'scoped memory for video_transformer_forward.1']
    #allocation7 [shape = 'u8[98304]{0}', space=vmem, size = 0x18000, scoped, tag = 'input window, operand 4, single buffered']
    #allocation8 [shape = 'u8[32768]{0}', space=vmem, size = 0x8000, scoped, tag = 'input window, operand 6, single buffered']
    #allocation9 [shape = 's32[1]{0}', space=sflag, size = 0x4, scoped, tag = 'scoped memory for video_transformer_forward.1']
    #allocation10 [shape = 'u8[1024]{0}', space=vmem, size = 0x400, scoped, tag = 'output window, operand 0']
    %14 = vsyncpa [#allocation3], 0
    %15 = vsyncpa [#allocation6], 0
    %16 = vsyncpa [#allocation9], 0
    %17 = vsyncpa [#allocation4], 0
    %s18 = scalar_lea.sflag [#allocation4], 1
    %19 = vsyncpa %s18, 0
    loop: start=0, step=1, limit=4
    $region2: #{video_transformer_forward.1} parent=1 // loop_pre_header
      _
    $region3: #{video_transformer_forward.1} parent=1 // loop_header
      %s21 = sphi 0, %s25
      %p22 = scmp.ge.s32.totalorder %s21, 4
      %s31 = sphi 0, %s33
      %s34 = sphi 0, %s31
      %s35 = sphi 0, %s34
      %s51 = sphi 0, %s35
      %s55 = sphi 0, %s55
      %s57 = sphi 0, %s55
      %s58 = sphi 0, %s57
      %s72 = sphi 0, %s58
      %s76 = sphi 0, %s76
      %s78 = sphi 0, %s76
      %s79 = sphi 0, %s78
      %s93 = sphi 0, %s79
      %s97 = sphi 0, %s97
      %s99 = sphi 0, %s97
      %s100 = sphi 0, %s99
      %s114 = sphi 0, %s100
      %s118 = sphi 0, %s118
      %s120 = sphi 0, %s118
      %s121 = sphi 0, %s120
      %s135 = sphi 0, %s121
      %s139 = sphi 0, %s139
      %s141 = sphi 0, %s139
      %s142 = sphi 0, %s141
      %s156 = sphi 0, %s142
      %s160 = sphi 0, %s160
      %s162 = sphi 0, %s160
      %s163 = sphi 0, %s162
      %s177 = sphi 0, %s163
      %s181 = sphi 0, %s181
      %s183 = sphi 0, %s181
      %s184 = sphi 0, %s183
      %s198 = sphi 0, %s184
      %s202 = sphi 0, %s202
      %s204 = sphi 0, %s202
      %s205 = sphi 0, %s204
      %s219 = sphi 0, %s205
      %s225 = sphi 0, %s227
      %s228 = sphi 0, %s225
      %s229 = sphi 0, %s228
      %s245 = sphi 0, %s229
    $region4: #{video_transformer_forward.1} parent=1 // loop_header_branch
      %24 = sbr.rel (%p22) target = $region8
    $region5: #{video_transformer_forward.1} parent=1 // loop_body
      %s26 = ssub.s32 %s21, 1
      %s27 = ssub.s32 %s21, 2
      %s28 = sadd.s32 %s21, 1
      %s29 = ssub.s32 %s21, %s28
      %p30 = scmp.eq.s32.totalorder %s29, 0
      %s32 = sadd.s32 %s31, 1
      %s33 = scalar_select %p30, %s31, %s32
      %p36 = pneg %p30
      %p37 = scmp.eq.s32.totalorder %s21, 1
      %p38 = por %p36, %p37
      %p39 = scmp.ne.s32.totalorder %s31, %s34
      %p40 = scmp.eq.s32.totalorder %s21, 0
      %p41 = por %p39, %p40
      %p42 = scmp.ne.s32.totalorder %s31, %s34
      %p43 = scmp.eq.s32.totalorder %s26, 1
      %p44 = por %p42, %p43
      %p45 = scmp.ne.s32.totalorder %s34, %s35
      %p46 = scmp.eq.s32.totalorder %s26, 0
      %p47 = por %p45, %p46
      %p48 = scmp.ne.s32.totalorder %s34, %s35
      %p49 = scmp.eq.s32.totalorder %s27, 1
      %p50 = por %p48, %p49
      %p52 = scmp.ne.s32.totalorder %s35, %s51
      %p53 = scmp.eq.s32.totalorder %s27, 0
      %p54 = por %p52, %p53
      %s56 = sadd.s32 %s55, 1
      %p59 = scmp.eq.s32.totalorder %s21, 1
      %p60 = scmp.ne.s32.totalorder %s55, %s57
      %p61 = scmp.eq.s32.totalorder %s21, 0
      %p62 = por %p60, %p61
      %p63 = scmp.ne.s32.totalorder %s55, %s57
      %p64 = scmp.eq.s32.totalorder %s26, 1
      %p65 = por %p63, %p64
      %p66 = scmp.ne.s32.totalorder %s57, %s58
      %p67 = scmp.eq.s32.totalorder %s26, 0
      %p68 = por %p66, %p67
      %p69 = scmp.ne.s32.totalorder %s57, %s58
      %p70 = scmp.eq.s32.totalorder %s27, 1
      %p71 = por %p69, %p70
      %p73 = scmp.ne.s32.totalorder %s58, %s72
      %p74 = scmp.eq.s32.totalorder %s27, 0
      %p75 = por %p73, %p74
      %s77 = sadd.s32 %s76, 1
      %p80 = scmp.eq.s32.totalorder %s21, 1
      %p81 = scmp.ne.s32.totalorder %s76, %s78
      %p82 = scmp.eq.s32.totalorder %s21, 0
      %p83 = por %p81, %p82
      %p84 = scmp.ne.s32.totalorder %s76, %s78
      %p85 = scmp.eq.s32.totalorder %s26, 1
      %p86 = por %p84, %p85
      %p87 = scmp.ne.s32.totalorder %s78, %s79
      %p88 = scmp.eq.s32.totalorder %s26, 0
      %p89 = por %p87, %p88
      %p90 = scmp.ne.s32.totalorder %s78, %s79
      %p91 = scmp.eq.s32.totalorder %s27, 1
      %p92 = por %p90, %p91
      %p94 = scmp.ne.s32.totalorder %s79, %s93
      %p95 = scmp.eq.s32.totalorder %s27, 0
      %p96 = por %p94, %p95
      %s98 = sadd.s32 %s97, 1
      %p101 = scmp.eq.s32.totalorder %s21, 1
      %p102 = scmp.ne.s32.totalorder %s97, %s99
      %p103 = scmp.eq.s32.totalorder %s21, 0
      %p104 = por %p102, %p103
      %p105 = scmp.ne.s32.totalorder %s97, %s99
      %p106 = scmp.eq.s32.totalorder %s26, 1
      %p107 = por %p105, %p106
      %p108 = scmp.ne.s32.totalorder %s99, %s100
      %p109 = scmp.eq.s32.totalorder %s26, 0
      %p110 = por %p108, %p109
      %p111 = scmp.ne.s32.totalorder %s99, %s100
      %p112 = scmp.eq.s32.totalorder %s27, 1
      %p113 = por %p111, %p112
      %p115 = scmp.ne.s32.totalorder %s100, %s114
      %p116 = scmp.eq.s32.totalorder %s27, 0
      %p117 = por %p115, %p116
      %s119 = sadd.s32 %s118, 1
      %p122 = scmp.eq.s32.totalorder %s21, 1
      %p123 = scmp.ne.s32.totalorder %s118, %s120
      %p124 = scmp.eq.s32.totalorder %s21, 0
      %p125 = por %p123, %p124
      %p126 = scmp.ne.s32.totalorder %s118, %s120
      %p127 = scmp.eq.s32.totalorder %s26, 1
      %p128 = por %p126, %p127
      %p129 = scmp.ne.s32.totalorder %s120, %s121
      %p130 = scmp.eq.s32.totalorder %s26, 0
      %p131 = por %p129, %p130
      %p132 = scmp.ne.s32.totalorder %s120, %s121
      %p133 = scmp.eq.s32.totalorder %s27, 1
      %p134 = por %p132, %p133
      %p136 = scmp.ne.s32.totalorder %s121, %s135
      %p137 = scmp.eq.s32.totalorder %s27, 0
      %p138 = por %p136, %p137
      %s140 = sadd.s32 %s139, 1
      %p143 = scmp.eq.s32.totalorder %s21, 1
      %p144 = scmp.ne.s32.totalorder %s139, %s141
      %p145 = scmp.eq.s32.totalorder %s21, 0
      %p146 = por %p144, %p145
      %p147 = scmp.ne.s32.totalorder %s139, %s141
      %p148 = scmp.eq.s32.totalorder %s26, 1
      %p149 = por %p147, %p148
      %p150 = scmp.ne.s32.totalorder %s141, %s142
      %p151 = scmp.eq.s32.totalorder %s26, 0
      %p152 = por %p150, %p151
      %p153 = scmp.ne.s32.totalorder %s141, %s142
      %p154 = scmp.eq.s32.totalorder %s27, 1
      %p155 = por %p153, %p154
      %p157 = scmp.ne.s32.totalorder %s142, %s156
      %p158 = scmp.eq.s32.totalorder %s27, 0
      %p159 = por %p157, %p158
      %s161 = sadd.s32 %s160, 1
      %p164 = scmp.eq.s32.totalorder %s21, 1
      %p165 = scmp.ne.s32.totalorder %s160, %s162
      %p166 = scmp.eq.s32.totalorder %s21, 0
      %p167 = por %p165, %p166
      %p168 = scmp.ne.s32.totalorder %s160, %s162
      %p169 = scmp.eq.s32.totalorder %s26, 1
      %p170 = por %p168, %p169
      %p171 = scmp.ne.s32.totalorder %s162, %s163
      %p172 = scmp.eq.s32.totalorder %s26, 0
      %p173 = por %p171, %p172
      %p174 = scmp.ne.s32.totalorder %s162, %s163
      %p175 = scmp.eq.s32.totalorder %s27, 1
      %p176 = por %p174, %p175
      %p178 = scmp.ne.s32.totalorder %s163, %s177
      %p179 = scmp.eq.s32.totalorder %s27, 0
      %p180 = por %p178, %p179
      %s182 = sadd.s32 %s181, 1
      %p185 = scmp.eq.s32.totalorder %s21, 1
      %p186 = scmp.ne.s32.totalorder %s181, %s183
      %p187 = scmp.eq.s32.totalorder %s21, 0
      %p188 = por %p186, %p187
      %p189 = scmp.ne.s32.totalorder %s181, %s183
      %p190 = scmp.eq.s32.totalorder %s26, 1
      %p191 = por %p189, %p190
      %p192 = scmp.ne.s32.totalorder %s183, %s184
      %p193 = scmp.eq.s32.totalorder %s26, 0
      %p194 = por %p192, %p193
      %p195 = scmp.ne.s32.totalorder %s183, %s184
      %p196 = scmp.eq.s32.totalorder %s27, 1
      %p197 = por %p195, %p196
      %p199 = scmp.ne.s32.totalorder %s184, %s198
      %p200 = scmp.eq.s32.totalorder %s27, 0
      %p201 = por %p199, %p200
      %s203 = sadd.s32 %s202, 1
      %p206 = scmp.eq.s32.totalorder %s21, 1
      %p207 = scmp.ne.s32.totalorder %s202, %s204
      %p208 = scmp.eq.s32.totalorder %s21, 0
      %p209 = por %p207, %p208
      %p210 = scmp.ne.s32.totalorder %s202, %s204
      %p211 = scmp.eq.s32.totalorder %s26, 1
      %p212 = por %p210, %p211
      %p213 = scmp.ne.s32.totalorder %s204, %s205
      %p214 = scmp.eq.s32.totalorder %s26, 0
      %p215 = por %p213, %p214
      %p216 = scmp.ne.s32.totalorder %s204, %s205
      %p217 = scmp.eq.s32.totalorder %s27, 1
      %p218 = por %p216, %p217
      %p220 = scmp.ne.s32.totalorder %s205, %s219
      %p221 = scmp.eq.s32.totalorder %s27, 0
      %p222 = por %p220, %p221
      %s223 = ssub.s32 %s21, %s28
      %p224 = scmp.eq.s32.totalorder %s223, 0
      %s226 = sadd.s32 %s225, 1
      %s227 = scalar_select %p224, %s225, %s226
      %p230 = pneg %p224
      %p231 = scmp.eq.s32.totalorder %s21, 1
      %p232 = por %p230, %p231
      %p233 = scmp.ne.s32.totalorder %s225, %s228
      %p234 = scmp.eq.s32.totalorder %s21, 0
      %p235 = por %p233, %p234
      %p236 = scmp.ne.s32.totalorder %s225, %s228
      %p237 = scmp.eq.s32.totalorder %s26, 1
      %p238 = por %p236, %p237
      %p239 = scmp.ne.s32.totalorder %s228, %s229
      %p240 = scmp.eq.s32.totalorder %s26, 0
      %p241 = por %p239, %p240
      %p242 = scmp.ne.s32.totalorder %s228, %s229
      %p243 = scmp.eq.s32.totalorder %s27, 1
      %p244 = por %p242, %p243
      %p246 = scmp.ne.s32.totalorder %s229, %s245
      %p247 = scmp.eq.s32.totalorder %s27, 0
      %p248 = por %p246, %p247
      %p249 = scmp.le.s32.totalorder 1, %s21
      %p250 = scmp.lt.s32.totalorder %s21, 3
      %p251 = pnand %p249, %p250
      %p252 = pneg %p251
      // Predicated region
      $region9: #{video_transformer_forward.1} parent=5 // pred_check
        _
      $region10: #{video_transformer_forward.1} parent=5 // pred_check_branch
        %254 = sbr.rel (%p251) target = $region12
      $region11: #{video_transformer_forward.1} parent=5 // pred_region
        %s255 = ssub.s32 %s21, 1
        // Predicated region
        $region13: #{video_transformer_forward.1} parent=11 // pred_check
          %p256 = pneg %p68
        $region14: #{video_transformer_forward.1} parent=11 // pred_check_branch
          %258 = sbr.rel (%p256) target = $region16
        $region15: #{video_transformer_forward.1} parent=11 // pred_region
          %260 = vsyncadd [#allocation3], 0
          %s261 = sshll.u32 %s1, 4
          %s262 = int_to_ptr.hbm [resolvable:$true] %s261
          %s263 = sshll.u32 [#allocation2], 4
          %s264 = int_to_ptr.vmem [resolvable:$true] %s263
          %269 = dma.hbm_to_vmem [thread:$0]  %s262, 4096, %s264, [#allocation3], 128, 128, 8
        $region16: #{video_transformer_forward.1} parent=11 // pred_fallthru
          _
        // Predicated region
        $region17: #{video_transformer_forward.1} parent=11 // pred_check
          %p270 = pneg %p89
        $region18: #{video_transformer_forward.1} parent=11 // pred_check_branch
          %272 = sbr.rel (%p270) target = $region20
        $region19: #{video_transformer_forward.1} parent=11 // pred_region
          _
        $region20: #{video_transformer_forward.1} parent=11 // pred_fallthru
          _
        // Predicated region
        $region21: #{video_transformer_forward.1} parent=11 // pred_check
          %p273 = pneg %p110
        $region22: #{video_transformer_forward.1} parent=11 // pred_check_branch
          %275 = sbr.rel (%p273) target = $region24
        $region23: #{video_transformer_forward.1} parent=11 // pred_region
          %277 = vsyncadd [#allocation6], 0
          %s278 = sshll.u32 %s3, 4
          %s279 = int_to_ptr.hbm [resolvable:$true] %s278
          %s280 = sshll.u32 [#allocation5], 4
          %s281 = int_to_ptr.vmem [resolvable:$true] %s280
          %286 = dma.hbm_to_vmem [thread:$0]  %s279, 1024, %s281, [#allocation6], 256, 256, 16
        $region24: #{video_transformer_forward.1} parent=11 // pred_fallthru
          _
        // Predicated region
        $region25: #{video_transformer_forward.1} parent=11 // pred_check
          %p287 = pneg %p131
        $region26: #{video_transformer_forward.1} parent=11 // pred_check_branch
          %289 = sbr.rel (%p287) target = $region28
        $region27: #{video_transformer_forward.1} parent=11 // pred_region
          %291 = vsyncadd [#allocation6], 0
          %s292 = sshll.u32 %s4, 4
          %s293 = int_to_ptr.hbm [resolvable:$true] %s292
          %s294 = sshll.u32 [#allocation7], 4
          %s295 = int_to_ptr.vmem [resolvable:$true] %s294
          %300 = dma.hbm_to_vmem [thread:$0]  %s293, 3072, %s295, [#allocation6], 128, 128, 8
        $region28: #{video_transformer_forward.1} parent=11 // pred_fallthru
          _
        // Predicated region
        $region29: #{video_transformer_forward.1} parent=11 // pred_check
          %p301 = pneg %p152
        $region30: #{video_transformer_forward.1} parent=11 // pred_check_branch
          %303 = sbr.rel (%p301) target = $region32
        $region31: #{video_transformer_forward.1} parent=11 // pred_region
          _
        $region32: #{video_transformer_forward.1} parent=11 // pred_fallthru
          _
        // Predicated region
        $region33: #{video_transformer_forward.1} parent=11 // pred_check
          %p304 = pneg %p173
        $region34: #{video_transformer_forward.1} parent=11 // pred_check_branch
          %306 = sbr.rel (%p304) target = $region36
        $region35: #{video_transformer_forward.1} parent=11 // pred_region
          %308 = vsyncadd [#allocation9], 0
          %s309 = sshll.u32 %s6, 4
          %s310 = int_to_ptr.hbm [resolvable:$true] %s309
          %s311 = sshll.u32 [#allocation8], 4
          %s312 = int_to_ptr.vmem [resolvable:$true] %s311
          %317 = dma.hbm_to_vmem [thread:$0]  %s310, 1024, %s312, [#allocation9], 128, 128, 8
        $region36: #{video_transformer_forward.1} parent=11 // pred_fallthru
          _
        // Predicated region
        $region37: #{video_transformer_forward.1} parent=11 // pred_check
          %p318 = pneg %p194
        $region38: #{video_transformer_forward.1} parent=11 // pred_check_branch
          %320 = sbr.rel (%p318) target = $region40
        $region39: #{video_transformer_forward.1} parent=11 // pred_region
          _
        $region40: #{video_transformer_forward.1} parent=11 // pred_fallthru
          _
        // Predicated region
        $region41: #{video_transformer_forward.1} parent=11 // pred_check
          %p321 = pneg %p215
        $region42: #{video_transformer_forward.1} parent=11 // pred_check_branch
          %323 = sbr.rel (%p321) target = $region44
        $region43: #{video_transformer_forward.1} parent=11 // pred_region
          _
        $region44: #{video_transformer_forward.1} parent=11 // pred_fallthru
          _
      $region12: #{video_transformer_forward.1} parent=5 // pred_fallthru
        _
      %p324 = scmp.lt.s32.totalorder %s21, 2
      // Predicated region
      $region45: #{video_transformer_forward.1} parent=5 // pred_check
        %p325 = pneg %p324
      $region46: #{video_transformer_forward.1} parent=5 // pred_check_branch
        %327 = sbr.rel (%p325) target = $region48
      $region47: #{video_transformer_forward.1} parent=5 // pred_region
        // Predicated region
        $region49: #{video_transformer_forward.1} parent=47 // pred_check
          %p328 = pneg %p41
        $region50: #{video_transformer_forward.1} parent=47 // pred_check_branch
          %330 = sbr.rel (%p328) target = $region52
        $region51: #{video_transformer_forward.1} parent=47 // pred_region
          %p331 = scmp.lt.s32.totalorder %s21, 1
          %s332 = scalar_select %p331, %s21, 1
          %s333 = smul.addr %s332, 2
          %s334 = smul.addr %s333, 8
          %s335 = scalar_lea.vmem %s0, %s334
        $region52: #{video_transformer_forward.1} parent=47 // pred_fallthru
          _
      $region48: #{video_transformer_forward.1} parent=5 // pred_fallthru
        _
      %p336 = scmp.le.s32.totalorder 1, %s21
      %p337 = scmp.lt.s32.totalorder %s21, 3
      %p338 = pnand %p336, %p337
      %p339 = pneg %p338
      // Predicated region
      $region53: #{video_transformer_forward.1} parent=5 // pred_check
        _
      $region54: #{video_transformer_forward.1} parent=5 // pred_check_branch
        %341 = sbr.rel (%p338) target = $region56
      $region55: #{video_transformer_forward.1} parent=5 // pred_region
        %s342 = ssub.s32 %s21, 1
        // Predicated region
        $region57: #{video_transformer_forward.1} parent=55 // pred_check
          %p343 = pneg %p68
        $region58: #{video_transformer_forward.1} parent=55 // pred_check_branch
          %345 = sbr.rel (%p343) target = $region60
        $region59: #{video_transformer_forward.1} parent=55 // pred_region
          %347 = dma.done [#allocation3], 4096
        $region60: #{video_transformer_forward.1} parent=55 // pred_fallthru
          _
        // Predicated region
        $region61: #{video_transformer_forward.1} parent=55 // pred_check
          %p348 = pneg %p110
        $region62: #{video_transformer_forward.1} parent=55 // pred_check_branch
          %350 = sbr.rel (%p348) target = $region64
        $region63: #{video_transformer_forward.1} parent=55 // pred_region
          %352 = dma.done [#allocation6], 1024
        $region64: #{video_transformer_forward.1} parent=55 // pred_fallthru
          _
        // Predicated region
        $region65: #{video_transformer_forward.1} parent=55 // pred_check
          %p353 = pneg %p131
        $region66: #{video_transformer_forward.1} parent=55 // pred_check_branch
          %355 = sbr.rel (%p353) target = $region68
        $region67: #{video_transformer_forward.1} parent=55 // pred_region
          %357 = dma.done [#allocation6], 3072
        $region68: #{video_transformer_forward.1} parent=55 // pred_fallthru
          _
        // Predicated region
        $region69: #{video_transformer_forward.1} parent=55 // pred_check
          %p358 = pneg %p173
        $region70: #{video_transformer_forward.1} parent=55 // pred_check_branch
          %360 = sbr.rel (%p358) target = $region72
        $region71: #{video_transformer_forward.1} parent=55 // pred_region
          %362 = dma.done [#allocation9], 1024
        $region72: #{video_transformer_forward.1} parent=55 // pred_fallthru
          _
        %p363 = scmp.lt.s32.totalorder %s26, 1
        %s364 = scalar_select %p363, %s26, 1
        %s365 = smul.addr %s364, 2
        %s366 = smul.addr %s365, 8
        %s367 = scalar_lea.vmem %s0, %s366
        %p368 = pneg %p47
        %p369 = pneg %p44
        %p370 = pneg %p68
        %p371 = pneg %p65
        %p372 = pneg %p89
        %p373 = pneg %p86
        %p374 = pneg %p110
        %p375 = pneg %p107
        %p376 = pneg %p131
        %p377 = pneg %p128
        %p378 = pneg %p152
        %p379 = pneg %p149
        %p380 = pneg %p173
        %p381 = pneg %p170
        %p382 = pneg %p194
        %p383 = pneg %p191
        %p384 = pneg %p215
        %p385 = pneg %p212
        %p386 = pneg %p241
        %p387 = pneg %p238
        %s388 = sand.u32 %s228, 1
        %s389 = scalar_lea.sflag [#allocation4], %s388
        %s390 = sand.u32 %s228, 1
        %s391 = scalar_lea.vmem [#allocation10], %s390
        %p392 = scmp.lt.s32.totalorder %s26, 1
        %s393 = scalar_select %p392, %s26, 1
        %s394 = smul.addr %s393, 2
        %s395 = smul.addr %s394, 8
        %s396 = scalar_lea.vmem %s0, %s395
        %v397 = vld [vmem:[%s396] sm:$0xff]
        %v398 = vld [vmem:[%s396 + $0x8] sm:$0xff]
        %v399 = vld [vmem:[#allocation2] sm:$0xff]
        %v400 = vld [vmem:[#allocation2 + $0x8] sm:$0xff]
        %v401 = vld [vmem:[#allocation2 + $0x10] sm:$0xff]
        %v402 = vld [vmem:[#allocation2 + $0x18] sm:$0xff]
        %v403 = vld [vmem:[#allocation2 + $0x20] sm:$0xff]
        %v404 = vld [vmem:[#allocation2 + $0x28] sm:$0xff]
        %v405 = vld [vmem:[#allocation2 + $0x30] sm:$0xff]
        %v406 = vld [vmem:[#allocation2 + $0x38] sm:$0xff]
        %v407 = vld [vmem:[#allocation2 + $0x40] sm:$0xff]
        %v408 = vld [vmem:[#allocation2 + $0x48] sm:$0xff]
        %v409 = vld [vmem:[#allocation2 + $0x50] sm:$0xff]
        %v410 = vld [vmem:[#allocation2 + $0x58] sm:$0xff]
        %v411 = vld [vmem:[#allocation2 + $0x60] sm:$0xff]
        %v412 = vld [vmem:[#allocation2 + $0x68] sm:$0xff]
        %v413 = vld [vmem:[#allocation2 + $0x70] sm:$0xff]
        %v414 = vld [vmem:[#allocation2 + $0x78] sm:$0xff]
        %v415 = vld [vmem:[#allocation2 + $0x80] sm:$0xff]
        %v416 = vld [vmem:[#allocation2 + $0x88] sm:$0xff]
        %v417 = vld [vmem:[#allocation2 + $0x90] sm:$0xff]
        %v418 = vld [vmem:[#allocation2 + $0x98] sm:$0xff]
        %v419 = vld [vmem:[#allocation2 + $0xa0] sm:$0xff]
        %v420 = vld [vmem:[#allocation2 + $0xa8] sm:$0xff]
        %v421 = vld [vmem:[#allocation2 + $0xb0] sm:$0xff]
        %v422 = vld [vmem:[#allocation2 + $0xb8] sm:$0xff]
        %v423 = vld [vmem:[#allocation2 + $0xc0] sm:$0xff]
        %v424 = vld [vmem:[#allocation2 + $0xc8] sm:$0xff]
        %v425 = vld [vmem:[#allocation2 + $0xd0] sm:$0xff]
        %v426 = vld [vmem:[#allocation2 + $0xd8] sm:$0xff]
        %v427 = vld [vmem:[#allocation2 + $0xe0] sm:$0xff]
        %v428 = vld [vmem:[#allocation2 + $0xe8] sm:$0xff]
        %v429 = vld [vmem:[#allocation2 + $0xf0] sm:$0xff]
        %v430 = vld [vmem:[#allocation2 + $0xf8] sm:$0xff]
        %v431 = vld [vmem:[%s2] sm:$0xff]
        %432 = vmatpush.msra.mxu0 %v414
        %433 = vmatpush.msra.mxu0 %v413
        %434 = vmatpush.msra.mxu0 %v412
        %435 = vmatpush.msra.mxu0 %v411
        %436 = vmatpush.msra.mxu0 %v410
        %437 = vmatpush.msra.mxu0 %v409
        %438 = vmatpush.msra.mxu0 %v408
        %439 = vmatpush.msra.mxu0 %v407
        %440 = vmatpush.msra.mxu0 %v406
        %441 = vmatpush.msra.mxu0 %v405
        %442 = vmatpush.msra.mxu0 %v404
        %443 = vmatpush.msra.mxu0 %v403
        %444 = vmatpush.msra.mxu0 %v402
        %445 = vmatpush.msra.mxu0 %v401
        %446 = vmatpush.msra.mxu0 %v400
        %447 = vmatpush.msra.mxu0 %v399
        %448 = vmatmul.f32.gmra.mxu0 %v397
        %v449 = vpop.f32.mrf.mxu0
        %v450 = vadd.f32 %v431, %v449
        %451 = vdwg.mxu0
        %452 = vmatpush.msra.mxu0 %v430
        %453 = vmatpush.msra.mxu0 %v429
        %454 = vmatpush.msra.mxu0 %v428
        %455 = vmatpush.msra.mxu0 %v427
        %456 = vmatpush.msra.mxu0 %v426
        %457 = vmatpush.msra.mxu0 %v425
        %458 = vmatpush.msra.mxu0 %v424
        %459 = vmatpush.msra.mxu0 %v423
        %460 = vmatpush.msra.mxu0 %v422
        %461 = vmatpush.msra.mxu0 %v421
        %462 = vmatpush.msra.mxu0 %v420
        %463 = vmatpush.msra.mxu0 %v419
        %464 = vmatpush.msra.mxu0 %v418
        %465 = vmatpush.msra.mxu0 %v417
        %466 = vmatpush.msra.mxu0 %v416
        %467 = vmatpush.msra.mxu0 %v415
        %468 = vmatmul.f32.gmra.mxu0 %v398
        %v469 = vpop.f32.mrf.mxu0
        %v470 = vadd.f32 %v450, %v469
        %471 = vdwg.mxu0
        %v472 = vmax.f32 %v470, 0.0
        %474 = vrot.lane.b32.xlu0 %v472, 96
        %v475 = vpop.permute.xlu0 %474
        %477 = vrot.lane.b32.xlu0 %v472, 64
        %v478 = vpop.permute.xlu0 %477
        %480 = vrot.lane.b32.xlu0 %v472, 32
        %v481 = vpop.permute.xlu0 %480
        %v483 = vld [vmem:[#allocation8] sm:$0xff]
        %v484 = vld [vmem:[#allocation8 + $0x8] sm:$0xff]
        %v485 = vld [vmem:[#allocation8 + $0x10] sm:$0xff]
        %v486 = vld [vmem:[#allocation8 + $0x18] sm:$0xff]
        %s487 = scalar_lea.vmem [#allocation8], 32
        %v488 = vld [vmem:[%s487] sm:$0xff]
        %v489 = vld [vmem:[%s487 + $0x8] sm:$0xff]
        %v490 = vld [vmem:[%s487 + $0x10] sm:$0xff]
        %v491 = vld [vmem:[%s487 + $0x18] sm:$0xff]
        %v492 = vld [vmem:[#allocation5] sm:$0xff]
        %v493 = vld [vmem:[#allocation5 + $0x8] sm:$0xff]
        %v494 = vld [vmem:[#allocation5 + $0x10] sm:$0xff]
        %v495 = vld [vmem:[#allocation5 + $0x18] sm:$0xff]
        %v496 = vld [vmem:[#allocation5 + $0x20] sm:$0xff]
        %v497 = vld [vmem:[#allocation5 + $0x28] sm:$0xff]
        %v498 = vld [vmem:[#allocation5 + $0x30] sm:$0xff]
        %v499 = vld [vmem:[#allocation5 + $0x38] sm:$0xff]
        %vm500 = vcmask 261120
        %v501 = vsel %vm500, %v472, 0
        %v503 = vsel %vm500, %v475, 0
        %v505 = vsel %vm500, %v478, 0
        %v507 = vsel %vm500, %v481, 0
        %509 = vmatpush.msra.mxu0 0.0
        %510 = vmatpush.msra.mxu0 0.0
        %511 = vmatpush.msra.mxu0 0.0
        %512 = vmatpush.msra.mxu0 0.0
        %513 = vmatpush.msra.mxu0 0.0
        %514 = vmatpush.msra.mxu0 0.0
        %515 = vmatpush.msra.mxu0 0.0
        %516 = vmatpush.msra.mxu0 0.0
        %517 = vmatpush.msra.mxu0 0.0
        %518 = vmatpush.msra.mxu0 0.0
        %519 = vmatpush.msra.mxu0 0.0
        %520 = vmatpush.msra.mxu0 0.0
        %521 = vmatpush.msra.mxu0 %v498
        %522 = vmatpush.msra.mxu0 %v496
        %523 = vmatpush.msra.mxu0 %v494
        %524 = vmatpush.msra.mxu0 %v492
        %525 = vmatmul.f32.gmra.mxu0 %v501
        %v526 = vpop.f32.mrf.mxu0
        %v527 = vadd.f32 0.0, %v526
        %528 = vmatmul.f32.gmra.mxu0 %v503
        %v529 = vpop.f32.mrf.mxu0
        %v530 = vadd.f32 0.0, %v529
        %531 = vmatmul.f32.gmra.mxu0 %v505
        %v532 = vpop.f32.mrf.mxu0
        %v533 = vadd.f32 0.0, %v532
        %534 = vmatmul.f32.gmra.mxu0 %v507
        %v535 = vpop.f32.mrf.mxu0
        %v536 = vadd.f32 0.0, %v535
        %537 = vdwg.mxu0
        %538 = vmatpush.msra.mxu0 0.0
        %539 = vmatpush.msra.mxu0 0.0
        %540 = vmatpush.msra.mxu0 0.0
        %541 = vmatpush.msra.mxu0 0.0
        %542 = vmatpush.msra.mxu0 0.0
        %543 = vmatpush.msra.mxu0 0.0
        %544 = vmatpush.msra.mxu0 0.0
        %545 = vmatpush.msra.mxu0 0.0
        %546 = vmatpush.msra.mxu0 0.0
        %547 = vmatpush.msra.mxu0 0.0
        %548 = vmatpush.msra.mxu0 0.0
        %549 = vmatpush.msra.mxu0 0.0
        %550 = vmatpush.msra.mxu0 %v499
        %551 = vmatpush.msra.mxu0 %v497
        %552 = vmatpush.msra.mxu0 %v495
        %553 = vmatpush.msra.mxu0 %v493
        %554 = vmatmul.f32.gmra.mxu0 %v501
        %v555 = vpop.f32.mrf.mxu0
        %v556 = vadd.f32 0.0, %v555
        %557 = vmatmul.f32.gmra.mxu0 %v503
        %v558 = vpop.f32.mrf.mxu0
        %v559 = vadd.f32 0.0, %v558
        %560 = vmatmul.f32.gmra.mxu0 %v505
        %v561 = vpop.f32.mrf.mxu0
        %v562 = vadd.f32 0.0, %v561
        %563 = vmatmul.f32.gmra.mxu0 %v507
        %v564 = vpop.f32.mrf.mxu0
        %v565 = vadd.f32 0.0, %v564
        %566 = vdwg.mxu0
        %v567 = vld [vmem:[%s5] sm:$0x1]
        %v568 = vperm.slane %v567, 0
        %v569 = vadd.f32 %v527, %v568
        %v570 = vadd.f32 %v530, %v568
        %v571 = vadd.f32 %v533, %v568
        %v572 = vadd.f32 %v536, %v568
        %v573 = vld [vmem:[%s5 + $0x1] sm:$0x1]
        %v574 = vperm.slane %v573, 0
        %576 = vrot.lane.b32.xlu0 %v574, 32
        %v577 = vpop.permute.xlu0 %576
        %v579 = vadd.f32 %v527, %v577
        %v580 = vadd.f32 %v530, %v577
        %v581 = vadd.f32 %v533, %v577
        %v582 = vadd.f32 %v536, %v577
        %v583 = vld [vmem:[%s5 + $0x2] sm:$0x1]
        %v584 = vperm.slane %v583, 0
        %586 = vrot.lane.b32.xlu0 %v584, 64
        %v587 = vpop.permute.xlu0 %586
        %v589 = vadd.f32 %v527, %v587
        %v590 = vadd.f32 %v530, %v587
        %v591 = vadd.f32 %v533, %v587
        %v592 = vadd.f32 %v536, %v587
        %597 = vrot.lane.b32.xlu0 %v579, 96
        %v598 = vpop.permute.xlu0 %597
        %599 = vrot.lane.b32.xlu0 %v580, 96
        %v600 = vpop.permute.xlu0 %599
        %601 = vrot.lane.b32.xlu0 %v581, 96
        %v602 = vpop.permute.xlu0 %601
        %603 = vrot.lane.b32.xlu0 %v582, 96
        %v604 = vpop.permute.xlu0 %603
        %v606 = vsel %vm500, %v569, 0
        %v609 = vsel %vm500, %v570, 0
        %v612 = vsel %vm500, %v571, 0
        %v615 = vsel %vm500, %v572, 0
        %v617 = vsel %vm500, %v598, 0
        %v619 = vsel %vm500, %v600, 0
        %v621 = vsel %vm500, %v602, 0
        %v623 = vsel %vm500, %v604, 0
        %625 = vmatpush.xpose.msra.mxu0 0.0
        %626 = vmatpush.xpose.msra.mxu0 0.0
        %627 = vmatpush.xpose.msra.mxu0 0.0
        %628 = vmatpush.xpose.msra.mxu0 0.0
        %629 = vmatpush.xpose.msra.mxu0 0.0
        %630 = vmatpush.xpose.msra.mxu0 0.0
        %631 = vmatpush.xpose.msra.mxu0 0.0
        %632 = vmatpush.xpose.msra.mxu0 0.0
        %633 = vmatpush.xpose.msra.mxu0 0.0
        %634 = vmatpush.xpose.msra.mxu0 0.0
        %635 = vmatpush.xpose.msra.mxu0 0.0
        %636 = vmatpush.xpose.msra.mxu0 0.0
        %637 = vmatpush.xpose.msra.mxu0 %v623
        %638 = vmatpush.xpose.msra.mxu0 %v621
        %639 = vmatpush.xpose.msra.mxu0 %v619
        %640 = vmatpush.xpose.msra.mxu0 %v617
        %641 = vmatmul.f32.gmra.mxu0 %v606
        %v642 = vpop.f32.mrf.mxu0
        %v643 = vadd.f32 %v483, %v642
        %644 = vmatmul.f32.gmra.mxu0 %v609
        %v645 = vpop.f32.mrf.mxu0
        %v646 = vadd.f32 %v484, %v645
        %647 = vmatmul.f32.gmra.mxu0 %v612
        %v648 = vpop.f32.mrf.mxu0
        %v649 = vadd.f32 %v485, %v648
        %650 = vmatmul.f32.gmra.mxu0 %v615
        %v651 = vpop.f32.mrf.mxu0
        %v652 = vadd.f32 %v486, %v651
        %653 = vdwg.mxu0
        %v654 = vsel %vm500, %v643, -inf
        %655 = vmax.xlane.f32.xlu0 %v654
        %v656 = vpop.xlane.xlu0 %655
        %v657 = vsel %vm500, %v646, -inf
        %658 = vmax.xlane.f32.xlu0 %v657
        %v659 = vpop.xlane.xlu0 %658
        %v660 = vsel %vm500, %v649, -inf
        %661 = vmax.xlane.f32.xlu0 %v660
        %v662 = vpop.xlane.xlu0 %661
        %v663 = vsel %vm500, %v652, -inf
        %664 = vmax.xlane.f32.xlu0 %v663
        %v665 = vpop.xlane.xlu0 %664
        %v666 = vsub.f32 %v643, %v656
        %v667 = vsub.f32 %v646, %v659
        %v668 = vsub.f32 %v649, %v662
        %v669 = vsub.f32 %v652, %v665
        %v670 = vmul.f32 %v666, 1.442695
        %v671 = vpow.pop %v670
        %v672 = vmul.f32 %v667, 1.442695
        %v673 = vpow.pop %v672
        %v674 = vmul.f32 %v668, 1.442695
        %v675 = vpow.pop %v674
        %v676 = vmul.f32 %v669, 1.442695
        %v677 = vpow.pop %v676
        %v678 = vsel %vm500, %v671, 0.0
        %679 = vadd.xlane.f32.xlu0 %v678
        %v680 = vpop.xlane.xlu0 %679
        %v681 = vsel %vm500, %v673, 0.0
        %682 = vadd.xlane.f32.xlu0 %v681
        %v683 = vpop.xlane.xlu0 %682
        %v684 = vsel %vm500, %v675, 0.0
        %685 = vadd.xlane.f32.xlu0 %v684
        %v686 = vpop.xlane.xlu0 %685
        %v687 = vsel %vm500, %v677, 0.0
        %688 = vadd.xlane.f32.xlu0 %v687
        %v689 = vpop.xlane.xlu0 %688
        %v690 = vrcp.pop %v680
        %v691 = vrcp.pop %v683
        %v692 = vrcp.pop %v686
        %v693 = vrcp.pop %v689
        %v694 = vmul.f32 %v671, %v690
        %v695 = vmul.f32 %v673, %v691
        %v696 = vmul.f32 %v675, %v692
        %v697 = vmul.f32 %v677, %v693
        %702 = vrot.lane.b32.xlu0 %v589, 64
        %v703 = vpop.permute.xlu0 %702
        %704 = vrot.lane.b32.xlu0 %v590, 64
        %v705 = vpop.permute.xlu0 %704
        %706 = vrot.lane.b32.xlu0 %v591, 64
        %v707 = vpop.permute.xlu0 %706
        %708 = vrot.lane.b32.xlu0 %v592, 64
        %v709 = vpop.permute.xlu0 %708
        %v715 = vsel %vm500, %v694, 0
        %v718 = vsel %vm500, %v695, 0
        %v721 = vsel %vm500, %v696, 0
        %v724 = vsel %vm500, %v697, 0
        %726 = vmatpush.msra.mxu0 0.0
        %727 = vmatpush.msra.mxu0 0.0
        %728 = vmatpush.msra.mxu0 0.0
        %729 = vmatpush.msra.mxu0 0.0
        %730 = vmatpush.msra.mxu0 0.0
        %731 = vmatpush.msra.mxu0 0.0
        %732 = vmatpush.msra.mxu0 0.0
        %733 = vmatpush.msra.mxu0 0.0
        %734 = vmatpush.msra.mxu0 0.0
        %735 = vmatpush.msra.mxu0 0.0
        %736 = vmatpush.msra.mxu0 0.0
        %737 = vmatpush.msra.mxu0 0.0
        %738 = vmatpush.msra.mxu0 %v709
        %739 = vmatpush.msra.mxu0 %v707
        %740 = vmatpush.msra.mxu0 %v705
        %741 = vmatpush.msra.mxu0 %v703
        %742 = vmatmul.f32.gmra.mxu0 %v715
        %v743 = vpop.f32.mrf.mxu0
        %v744 = vadd.f32 0.0, %v743
        %745 = vmatmul.f32.gmra.mxu0 %v718
        %v746 = vpop.f32.mrf.mxu0
        %v747 = vadd.f32 0.0, %v746
        %748 = vmatmul.f32.gmra.mxu0 %v721
        %v749 = vpop.f32.mrf.mxu0
        %v750 = vadd.f32 0.0, %v749
        %751 = vmatmul.f32.gmra.mxu0 %v724
        %v752 = vpop.f32.mrf.mxu0
        %v753 = vadd.f32 0.0, %v752
        %754 = vdwg.mxu0
        %v755 = vld [vmem:[#allocation7] sm:$0xff]
        %v756 = vld [vmem:[#allocation7 + $0x8] sm:$0xff]
        %v757 = vld [vmem:[#allocation7 + $0x10] sm:$0xff]
        %v758 = vld [vmem:[#allocation7 + $0x18] sm:$0xff]
        %v759 = vld [vmem:[%s5 + $0x3] sm:$0x1]
        %v760 = vperm.slane %v759, 0
        %v762 = vsel %vm500, %v744, 0
        %v765 = vsel %vm500, %v747, 0
        %v768 = vsel %vm500, %v750, 0
        %v771 = vsel %vm500, %v753, 0
        %773 = vmatpush.msra.mxu0 0.0
        %774 = vmatpush.msra.mxu0 0.0
        %775 = vmatpush.msra.mxu0 0.0
        %776 = vmatpush.msra.mxu0 0.0
        %777 = vmatpush.msra.mxu0 0.0
        %778 = vmatpush.msra.mxu0 0.0
        %779 = vmatpush.msra.mxu0 0.0
        %780 = vmatpush.msra.mxu0 0.0
        %781 = vmatpush.msra.mxu0 0.0
        %782 = vmatpush.msra.mxu0 0.0
        %783 = vmatpush.msra.mxu0 0.0
        %784 = vmatpush.msra.mxu0 0.0
        %785 = vmatpush.msra.mxu0 %v758
        %786 = vmatpush.msra.mxu0 %v757
        %787 = vmatpush.msra.mxu0 %v756
        %788 = vmatpush.msra.mxu0 %v755
        %789 = vmatmul.f32.gmra.mxu0 %v762
        %v790 = vpop.f32.mrf.mxu0
        %v791 = vadd.f32 %v760, %v790
        %792 = vmatmul.f32.gmra.mxu0 %v765
        %v793 = vpop.f32.mrf.mxu0
        %v794 = vadd.f32 %v760, %v793
        %795 = vmatmul.f32.gmra.mxu0 %v768
        %v796 = vpop.f32.mrf.mxu0
        %v797 = vadd.f32 %v760, %v796
        %798 = vmatmul.f32.gmra.mxu0 %v771
        %v799 = vpop.f32.mrf.mxu0
        %v800 = vadd.f32 %v760, %v799
        %801 = vdwg.mxu0
        %v802 = vmax.f32 %v791, 0.0
        %v803 = vmax.f32 %v794, 0.0
        %v804 = vmax.f32 %v797, 0.0
        %v805 = vmax.f32 %v800, 0.0
        %v806 = vadd.f32 %v472, %v802
        %v807 = vadd.f32 %v475, %v803
        %v808 = vadd.f32 %v478, %v804
        %v809 = vadd.f32 %v481, %v805
        %v810 = vld [vmem:[%s5 + $0x6] sm:$0x1]
        %v811 = vld [vmem:[%s5 + $0x7] sm:$0x1]
        %v812 = vsel %vm500, %v806, 0.0
        %813 = vadd.xlane.f32.xlu0 %v812
        %v814 = vpop.xlane.xlu0 %813
        %v815 = vsel %vm500, %v807, 0.0
        %816 = vadd.xlane.f32.xlu0 %v815
        %v817 = vpop.xlane.xlu0 %816
        %v818 = vsel %vm500, %v808, 0.0
        %819 = vadd.xlane.f32.xlu0 %v818
        %v820 = vpop.xlane.xlu0 %819
        %v821 = vsel %vm500, %v809, 0.0
        %822 = vadd.xlane.f32.xlu0 %v821
        %v823 = vpop.xlane.xlu0 %822
        %v824 = vrcp.pop 32.0
        %v825 = vmul.f32 32.0, %v824
        %v826 = vsub.f32 1.0, %v825
        %v827 = vmul.f32 %v824, %v826
        %v828 = vadd.f32 %v824, %v827
        %vm829 = vweird.f32 %v824
        %v830 = vsel %vm829, %v824, %v828
        %v831 = vmul.f32 %v814, %v830
        %v832 = vmul.f32 %v817, %v830
        %v833 = vmul.f32 %v820, %v830
        %v834 = vmul.f32 %v823, %v830
        %v835 = vsub.f32 %v806, %v831
        %v836 = vsub.f32 %v807, %v832
        %v837 = vsub.f32 %v808, %v833
        %v838 = vsub.f32 %v809, %v834
        %v839 = vmul.f32 %v835, %v835
        %v840 = vmul.f32 %v836, %v836
        %v841 = vmul.f32 %v837, %v837
        %v842 = vmul.f32 %v838, %v838
        %v843 = vsel %vm500, %v839, 0.0
        %844 = vadd.xlane.f32.xlu0 %v843
        %v845 = vpop.xlane.xlu0 %844
        %v846 = vsel %vm500, %v840, 0.0
        %847 = vadd.xlane.f32.xlu0 %v846
        %v848 = vpop.xlane.xlu0 %847
        %v849 = vsel %vm500, %v841, 0.0
        %850 = vadd.xlane.f32.xlu0 %v849
        %v851 = vpop.xlane.xlu0 %850
        %v852 = vsel %vm500, %v842, 0.0
        %853 = vadd.xlane.f32.xlu0 %v852
        %v854 = vpop.xlane.xlu0 %853
        %v855 = vmul.f32 %v845, %v830
        %v856 = vmul.f32 %v848, %v830
        %v857 = vmul.f32 %v851, %v830
        %v858 = vmul.f32 %v854, %v830
        %v859 = vadd.f32 %v855, 1e-05
        %v860 = vadd.f32 %v856, 1e-05
        %v861 = vadd.f32 %v857, 1e-05
        %v862 = vadd.f32 %v858, 1e-05
        %v863 = vrsqrt.pop %v859
        %v864 = vmul.f32 %v863, %v859
        %v865 = vmul.f32 %v864, %v863
        %v866 = vmul.f32 0.5, %v865
        %v867 = vsub.f32 1.5, %v866
        %v868 = vmul.f32 %v863, %v867
        %vm869 = vweird.f32 %v859
        %vm870 = vweird.f32 %v863
        %vm871 = vmor %vm869, %vm870
        %v872 = vsel %vm871, %v863, %v868
        %v873 = vrsqrt.pop %v860
        %v874 = vmul.f32 %v873, %v860
        %v875 = vmul.f32 %v874, %v873
        %v876 = vmul.f32 0.5, %v875
        %v877 = vsub.f32 1.5, %v876
        %v878 = vmul.f32 %v873, %v877
        %vm879 = vweird.f32 %v860
        %vm880 = vweird.f32 %v873
        %vm881 = vmor %vm879, %vm880
        %v882 = vsel %vm881, %v873, %v878
        %v883 = vrsqrt.pop %v861
        %v884 = vmul.f32 %v883, %v861
        %v885 = vmul.f32 %v884, %v883
        %v886 = vmul.f32 0.5, %v885
        %v887 = vsub.f32 1.5, %v886
        %v888 = vmul.f32 %v883, %v887
        %vm889 = vweird.f32 %v861
        %vm890 = vweird.f32 %v883
        %vm891 = vmor %vm889, %vm890
        %v892 = vsel %vm891, %v883, %v888
        %v893 = vrsqrt.pop %v862
        %v894 = vmul.f32 %v893, %v862
        %v895 = vmul.f32 %v894, %v893
        %v896 = vmul.f32 0.5, %v895
        %v897 = vsub.f32 1.5, %v896
        %v898 = vmul.f32 %v893, %v897
        %vm899 = vweird.f32 %v862
        %vm900 = vweird.f32 %v893
        %vm901 = vmor %vm899, %vm900
        %v902 = vsel %vm901, %v893, %v898
        %v903 = vmul.f32 %v835, %v872
        %v904 = vmul.f32 %v836, %v882
        %v905 = vmul.f32 %v837, %v892
        %v906 = vmul.f32 %v838, %v902
        %v907 = vperm.slane %v810, 0
        %v908 = vmul.f32 %v903, %v907
        %v909 = vmul.f32 %v904, %v907
        %v910 = vmul.f32 %v905, %v907
        %v911 = vmul.f32 %v906, %v907
        %v912 = vperm.slane %v811, 0
        %v913 = vadd.f32 %v908, %v912
        %v914 = vadd.f32 %v909, %v912
        %v915 = vadd.f32 %v910, %v912
        %v916 = vadd.f32 %v911, %v912
        %s917 = scalar_lea.vmem [#allocation7], 32
        %v918 = vld [vmem:[%s917] sm:$0xff]
        %v919 = vld [vmem:[%s917 + $0x8] sm:$0xff]
        %v920 = vld [vmem:[%s917 + $0x10] sm:$0xff]
        %v921 = vld [vmem:[%s917 + $0x18] sm:$0xff]
        %v922 = vld [vmem:[%s5 + $0x4] sm:$0x1]
        %v923 = vperm.slane %v922, 0
        %v925 = vsel %vm500, %v913, 0
        %v928 = vsel %vm500, %v914, 0
        %v931 = vsel %vm500, %v915, 0
        %v934 = vsel %vm500, %v916, 0
        %936 = vmatpush.msra.mxu0 0.0
        %937 = vmatpush.msra.mxu0 0.0
        %938 = vmatpush.msra.mxu0 0.0
        %939 = vmatpush.msra.mxu0 0.0
        %940 = vmatpush.msra.mxu0 0.0
        %941 = vmatpush.msra.mxu0 0.0
        %942 = vmatpush.msra.mxu0 0.0
        %943 = vmatpush.msra.mxu0 0.0
        %944 = vmatpush.msra.mxu0 0.0
        %945 = vmatpush.msra.mxu0 0.0
        %946 = vmatpush.msra.mxu0 0.0
        %947 = vmatpush.msra.mxu0 0.0
        %948 = vmatpush.msra.mxu0 %v921
        %949 = vmatpush.msra.mxu0 %v920
        %950 = vmatpush.msra.mxu0 %v919
        %951 = vmatpush.msra.mxu0 %v918
        %952 = vmatmul.f32.gmra.mxu0 %v925
        %v953 = vpop.f32.mrf.mxu0
        %v954 = vadd.f32 %v923, %v953
        %955 = vmatmul.f32.gmra.mxu0 %v928
        %v956 = vpop.f32.mrf.mxu0
        %v957 = vadd.f32 %v923, %v956
        %958 = vmatmul.f32.gmra.mxu0 %v931
        %v959 = vpop.f32.mrf.mxu0
        %v960 = vadd.f32 %v923, %v959
        %961 = vmatmul.f32.gmra.mxu0 %v934
        %v962 = vpop.f32.mrf.mxu0
        %v963 = vadd.f32 %v923, %v962
        %964 = vdwg.mxu0
        %v965 = vmax.f32 %v954, 0.0
        %v966 = vmax.f32 %v957, 0.0
        %v967 = vmax.f32 %v960, 0.0
        %v968 = vmax.f32 %v963, 0.0
        %s969 = scalar_lea.vmem [#allocation7], 64
        %v970 = vld [vmem:[%s969] sm:$0xff]
        %v971 = vld [vmem:[%s969 + $0x8] sm:$0xff]
        %v972 = vld [vmem:[%s969 + $0x10] sm:$0xff]
        %v973 = vld [vmem:[%s969 + $0x18] sm:$0xff]
        %v974 = vld [vmem:[%s5 + $0x5] sm:$0x1]
        %v975 = vperm.slane %v974, 0
        %v977 = vsel %vm500, %v965, 0
        %v980 = vsel %vm500, %v966, 0
        %v983 = vsel %vm500, %v967, 0
        %v986 = vsel %vm500, %v968, 0
        %988 = vmatpush.msra.mxu0 0.0
        %989 = vmatpush.msra.mxu0 0.0
        %990 = vmatpush.msra.mxu0 0.0
        %991 = vmatpush.msra.mxu0 0.0
        %992 = vmatpush.msra.mxu0 0.0
        %993 = vmatpush.msra.mxu0 0.0
        %994 = vmatpush.msra.mxu0 0.0
        %995 = vmatpush.msra.mxu0 0.0
        %996 = vmatpush.msra.mxu0 0.0
        %997 = vmatpush.msra.mxu0 0.0
        %998 = vmatpush.msra.mxu0 0.0
        %999 = vmatpush.msra.mxu0 0.0
        %1000 = vmatpush.msra.mxu0 %v973
        %1001 = vmatpush.msra.mxu0 %v972
        %1002 = vmatpush.msra.mxu0 %v971
        %1003 = vmatpush.msra.mxu0 %v970
        %1004 = vmatmul.f32.gmra.mxu0 %v977
        %v1005 = vpop.f32.mrf.mxu0
        %v1006 = vadd.f32 %v975, %v1005
        %1007 = vmatmul.f32.gmra.mxu0 %v980
        %v1008 = vpop.f32.mrf.mxu0
        %v1009 = vadd.f32 %v975, %v1008
        %1010 = vmatmul.f32.gmra.mxu0 %v983
        %v1011 = vpop.f32.mrf.mxu0
        %v1012 = vadd.f32 %v975, %v1011
        %1013 = vmatmul.f32.gmra.mxu0 %v986
        %v1014 = vpop.f32.mrf.mxu0
        %v1015 = vadd.f32 %v975, %v1014
        %1016 = vdwg.mxu0
        %v1017 = vadd.f32 %v913, %v1006
        %v1018 = vadd.f32 %v914, %v1009
        %v1019 = vadd.f32 %v915, %v1012
        %v1020 = vadd.f32 %v916, %v1015
        %v1021 = vld [vmem:[%s5 + $0x8] sm:$0x1]
        %v1022 = vld [vmem:[%s5 + $0x9] sm:$0x1]
        %v1023 = vsel %vm500, %v1017, 0.0
        %1024 = vadd.xlane.f32.xlu0 %v1023
        %v1025 = vpop.xlane.xlu0 %1024
        %v1026 = vsel %vm500, %v1018, 0.0
        %1027 = vadd.xlane.f32.xlu0 %v1026
        %v1028 = vpop.xlane.xlu0 %1027
        %v1029 = vsel %vm500, %v1019, 0.0
        %1030 = vadd.xlane.f32.xlu0 %v1029
        %v1031 = vpop.xlane.xlu0 %1030
        %v1032 = vsel %vm500, %v1020, 0.0
        %1033 = vadd.xlane.f32.xlu0 %v1032
        %v1034 = vpop.xlane.xlu0 %1033
        %v1035 = vmul.f32 %v1025, %v830
        %v1036 = vmul.f32 %v1028, %v830
        %v1037 = vmul.f32 %v1031, %v830
        %v1038 = vmul.f32 %v1034, %v830
        %v1039 = vsub.f32 %v1017, %v1035
        %v1040 = vsub.f32 %v1018, %v1036
        %v1041 = vsub.f32 %v1019, %v1037
        %v1042 = vsub.f32 %v1020, %v1038
        %v1043 = vmul.f32 %v1039, %v1039
        %v1044 = vmul.f32 %v1040, %v1040
        %v1045 = vmul.f32 %v1041, %v1041
        %v1046 = vmul.f32 %v1042, %v1042
        %v1047 = vsel %vm500, %v1043, 0.0
        %1048 = vadd.xlane.f32.xlu0 %v1047
        %v1049 = vpop.xlane.xlu0 %1048
        %v1050 = vsel %vm500, %v1044, 0.0
        %1051 = vadd.xlane.f32.xlu0 %v1050
        %v1052 = vpop.xlane.xlu0 %1051
        %v1053 = vsel %vm500, %v1045, 0.0
        %1054 = vadd.xlane.f32.xlu0 %v1053
        %v1055 = vpop.xlane.xlu0 %1054
        %v1056 = vsel %vm500, %v1046, 0.0
        %1057 = vadd.xlane.f32.xlu0 %v1056
        %v1058 = vpop.xlane.xlu0 %1057
        %v1059 = vmul.f32 %v1049, %v830
        %v1060 = vmul.f32 %v1052, %v830
        %v1061 = vmul.f32 %v1055, %v830
        %v1062 = vmul.f32 %v1058, %v830
        %v1063 = vadd.f32 %v1059, 1e-05
        %v1064 = vadd.f32 %v1060, 1e-05
        %v1065 = vadd.f32 %v1061, 1e-05
        %v1066 = vadd.f32 %v1062, 1e-05
        %v1067 = vrsqrt.pop %v1063
        %v1068 = vmul.f32 %v1067, %v1063
        %v1069 = vmul.f32 %v1068, %v1067
        %v1070 = vmul.f32 0.5, %v1069
        %v1071 = vsub.f32 1.5, %v1070
        %v1072 = vmul.f32 %v1067, %v1071
        %vm1073 = vweird.f32 %v1063
        %vm1074 = vweird.f32 %v1067
        %vm1075 = vmor %vm1073, %vm1074
        %v1076 = vsel %vm1075, %v1067, %v1072
        %v1077 = vrsqrt.pop %v1064
        %v1078 = vmul.f32 %v1077, %v1064
        %v1079 = vmul.f32 %v1078, %v1077
        %v1080 = vmul.f32 0.5, %v1079
        %v1081 = vsub.f32 1.5, %v1080
        %v1082 = vmul.f32 %v1077, %v1081
        %vm1083 = vweird.f32 %v1064
        %vm1084 = vweird.f32 %v1077
        %vm1085 = vmor %vm1083, %vm1084
        %v1086 = vsel %vm1085, %v1077, %v1082
        %v1087 = vrsqrt.pop %v1065
        %v1088 = vmul.f32 %v1087, %v1065
        %v1089 = vmul.f32 %v1088, %v1087
        %v1090 = vmul.f32 0.5, %v1089
        %v1091 = vsub.f32 1.5, %v1090
        %v1092 = vmul.f32 %v1087, %v1091
        %vm1093 = vweird.f32 %v1065
        %vm1094 = vweird.f32 %v1087
        %vm1095 = vmor %vm1093, %vm1094
        %v1096 = vsel %vm1095, %v1087, %v1092
        %v1097 = vrsqrt.pop %v1066
        %v1098 = vmul.f32 %v1097, %v1066
        %v1099 = vmul.f32 %v1098, %v1097
        %v1100 = vmul.f32 0.5, %v1099
        %v1101 = vsub.f32 1.5, %v1100
        %v1102 = vmul.f32 %v1097, %v1101
        %vm1103 = vweird.f32 %v1066
        %vm1104 = vweird.f32 %v1097
        %vm1105 = vmor %vm1103, %vm1104
        %v1106 = vsel %vm1105, %v1097, %v1102
        %v1107 = vmul.f32 %v1039, %v1076
        %v1108 = vmul.f32 %v1040, %v1086
        %v1109 = vmul.f32 %v1041, %v1096
        %v1110 = vmul.f32 %v1042, %v1106
        %v1111 = vperm.slane %v1021, 0
        %v1112 = vmul.f32 %v1107, %v1111
        %v1113 = vmul.f32 %v1108, %v1111
        %v1114 = vmul.f32 %v1109, %v1111
        %v1115 = vmul.f32 %v1110, %v1111
        %v1116 = vperm.slane %v1022, 0
        %v1117 = vadd.f32 %v1112, %v1116
        %v1118 = vadd.f32 %v1113, %v1116
        %v1119 = vadd.f32 %v1114, %v1116
        %v1120 = vadd.f32 %v1115, %v1116
        %s1121 = scalar_lea.vmem %s5, 16
        %v1122 = vld [vmem:[%s1121] sm:$0x1]
        %v1123 = vperm.slane %v1122, 0
        %1125 = vrot.lane.b32.xlu0 %v1123, 96
        %v1126 = vpop.permute.xlu0 %1125
        %v1128 = vadd.f32 %v527, %v1126
        %v1129 = vadd.f32 %v530, %v1126
        %v1130 = vadd.f32 %v533, %v1126
        %v1131 = vadd.f32 %v536, %v1126
        %v1132 = vld [vmem:[%s1121 + $0x1] sm:$0x1]
        %v1133 = vperm.slane %v1132, 0
        %v1134 = vadd.f32 %v556, %v1133
        %v1135 = vadd.f32 %v559, %v1133
        %v1136 = vadd.f32 %v562, %v1133
        %v1137 = vadd.f32 %v565, %v1133
        %v1138 = vld [vmem:[%s1121 + $0x2] sm:$0x1]
        %v1139 = vperm.slane %v1138, 0
        %1141 = vrot.lane.b32.xlu0 %v1139, 32
        %v1142 = vpop.permute.xlu0 %1141
        %v1144 = vadd.f32 %v556, %v1142
        %v1145 = vadd.f32 %v559, %v1142
        %v1146 = vadd.f32 %v562, %v1142
        %v1147 = vadd.f32 %v565, %v1142
        %1152 = vrot.lane.b32.xlu0 %v1128, 32
        %v1153 = vpop.permute.xlu0 %1152
        %1154 = vrot.lane.b32.xlu0 %v1129, 32
        %v1155 = vpop.permute.xlu0 %1154
        %1156 = vrot.lane.b32.xlu0 %v1130, 32
        %v1157 = vpop.permute.xlu0 %1156
        %1158 = vrot.lane.b32.xlu0 %v1131, 32
        %v1159 = vpop.permute.xlu0 %1158
        %v1160 = vsel %vm500, %v1153, 0
        %v1162 = vsel %vm500, %v1155, 0
        %v1164 = vsel %vm500, %v1157, 0
        %v1166 = vsel %vm500, %v1159, 0
        %v1169 = vsel %vm500, %v1134, 0
        %v1172 = vsel %vm500, %v1135, 0
        %v1175 = vsel %vm500, %v1136, 0
        %v1178 = vsel %vm500, %v1137, 0
        %1180 = vmatpush.xpose.msra.mxu0 0.0
        %1181 = vmatpush.xpose.msra.mxu0 0.0
        %1182 = vmatpush.xpose.msra.mxu0 0.0
        %1183 = vmatpush.xpose.msra.mxu0 0.0
        %1184 = vmatpush.xpose.msra.mxu0 0.0
        %1185 = vmatpush.xpose.msra.mxu0 0.0
        %1186 = vmatpush.xpose.msra.mxu0 0.0
        %1187 = vmatpush.xpose.msra.mxu0 0.0
        %1188 = vmatpush.xpose.msra.mxu0 0.0
        %1189 = vmatpush.xpose.msra.mxu0 0.0
        %1190 = vmatpush.xpose.msra.mxu0 0.0
        %1191 = vmatpush.xpose.msra.mxu0 0.0
        %1192 = vmatpush.xpose.msra.mxu0 %v1178
        %1193 = vmatpush.xpose.msra.mxu0 %v1175
        %1194 = vmatpush.xpose.msra.mxu0 %v1172
        %1195 = vmatpush.xpose.msra.mxu0 %v1169
        %1196 = vmatmul.f32.gmra.mxu0 %v1160
        %v1197 = vpop.f32.mrf.mxu0
        %v1198 = vadd.f32 %v488, %v1197
        %1199 = vmatmul.f32.gmra.mxu0 %v1162
        %v1200 = vpop.f32.mrf.mxu0
        %v1201 = vadd.f32 %v489, %v1200
        %1202 = vmatmul.f32.gmra.mxu0 %v1164
        %v1203 = vpop.f32.mrf.mxu0
        %v1204 = vadd.f32 %v490, %v1203
        %1205 = vmatmul.f32.gmra.mxu0 %v1166
        %v1206 = vpop.f32.mrf.mxu0
        %v1207 = vadd.f32 %v491, %v1206
        %1208 = vdwg.mxu0
        %v1209 = vsel %vm500, %v1198, -inf
        %1210 = vmax.xlane.f32.xlu0 %v1209
        %v1211 = vpop.xlane.xlu0 %1210
        %v1212 = vsel %vm500, %v1201, -inf
        %1213 = vmax.xlane.f32.xlu0 %v1212
        %v1214 = vpop.xlane.xlu0 %1213
        %v1215 = vsel %vm500, %v1204, -inf
        %1216 = vmax.xlane.f32.xlu0 %v1215
        %v1217 = vpop.xlane.xlu0 %1216
        %v1218 = vsel %vm500, %v1207, -inf
        %1219 = vmax.xlane.f32.xlu0 %v1218
        %v1220 = vpop.xlane.xlu0 %1219
        %v1221 = vsub.f32 %v1198, %v1211
        %v1222 = vsub.f32 %v1201, %v1214
        %v1223 = vsub.f32 %v1204, %v1217
        %v1224 = vsub.f32 %v1207, %v1220
        %v1225 = vmul.f32 %v1221, 1.442695
        %v1226 = vpow.pop %v1225
        %v1227 = vmul.f32 %v1222, 1.442695
        %v1228 = vpow.pop %v1227
        %v1229 = vmul.f32 %v1223, 1.442695
        %v1230 = vpow.pop %v1229
        %v1231 = vmul.f32 %v1224, 1.442695
        %v1232 = vpow.pop %v1231
        %v1233 = vsel %vm500, %v1226, 0.0
        %1234 = vadd.xlane.f32.xlu0 %v1233
        %v1235 = vpop.xlane.xlu0 %1234
        %v1236 = vsel %vm500, %v1228, 0.0
        %1237 = vadd.xlane.f32.xlu0 %v1236
        %v1238 = vpop.xlane.xlu0 %1237
        %v1239 = vsel %vm500, %v1230, 0.0
        %1240 = vadd.xlane.f32.xlu0 %v1239
        %v1241 = vpop.xlane.xlu0 %1240
        %v1242 = vsel %vm500, %v1232, 0.0
        %1243 = vadd.xlane.f32.xlu0 %v1242
        %v1244 = vpop.xlane.xlu0 %1243
        %v1245 = vrcp.pop %v1235
        %v1246 = vrcp.pop %v1238
        %v1247 = vrcp.pop %v1241
        %v1248 = vrcp.pop %v1244
        %v1249 = vmul.f32 %v1226, %v1245
        %v1250 = vmul.f32 %v1228, %v1246
        %v1251 = vmul.f32 %v1230, %v1247
        %v1252 = vmul.f32 %v1232, %v1248
        %1257 = vrot.lane.b32.xlu0 %v1144, 96
        %v1258 = vpop.permute.xlu0 %1257
        %1259 = vrot.lane.b32.xlu0 %v1145, 96
        %v1260 = vpop.permute.xlu0 %1259
        %1261 = vrot.lane.b32.xlu0 %v1146, 96
        %v1262 = vpop.permute.xlu0 %1261
        %1263 = vrot.lane.b32.xlu0 %v1147, 96
        %v1264 = vpop.permute.xlu0 %1263
        %v1270 = vsel %vm500, %v1249, 0
        %v1273 = vsel %vm500, %v1250, 0
        %v1276 = vsel %vm500, %v1251, 0
        %v1279 = vsel %vm500, %v1252, 0
        %1281 = vmatpush.msra.mxu0 0.0
        %1282 = vmatpush.msra.mxu0 0.0
        %1283 = vmatpush.msra.mxu0 0.0
        %1284 = vmatpush.msra.mxu0 0.0
        %1285 = vmatpush.msra.mxu0 0.0
        %1286 = vmatpush.msra.mxu0 0.0
        %1287 = vmatpush.msra.mxu0 0.0
        %1288 = vmatpush.msra.mxu0 0.0
        %1289 = vmatpush.msra.mxu0 0.0
        %1290 = vmatpush.msra.mxu0 0.0
        %1291 = vmatpush.msra.mxu0 0.0
        %1292 = vmatpush.msra.mxu0 0.0
        %1293 = vmatpush.msra.mxu0 %v1264
        %1294 = vmatpush.msra.mxu0 %v1262
        %1295 = vmatpush.msra.mxu0 %v1260
        %1296 = vmatpush.msra.mxu0 %v1258
        %1297 = vmatmul.f32.gmra.mxu0 %v1270
        %v1298 = vpop.f32.mrf.mxu0
        %v1299 = vadd.f32 0.0, %v1298
        %1300 = vmatmul.f32.gmra.mxu0 %v1273
        %v1301 = vpop.f32.mrf.mxu0
        %v1302 = vadd.f32 0.0, %v1301
        %1303 = vmatmul.f32.gmra.mxu0 %v1276
        %v1304 = vpop.f32.mrf.mxu0
        %v1305 = vadd.f32 0.0, %v1304
        %1306 = vmatmul.f32.gmra.mxu0 %v1279
        %v1307 = vpop.f32.mrf.mxu0
        %v1308 = vadd.f32 0.0, %v1307
        %1309 = vdwg.mxu0
        %s1310 = scalar_lea.vmem [#allocation7], 96
        %v1311 = vld [vmem:[%s1310] sm:$0xff]
        %v1312 = vld [vmem:[%s1310 + $0x8] sm:$0xff]
        %v1313 = vld [vmem:[%s1310 + $0x10] sm:$0xff]
        %v1314 = vld [vmem:[%s1310 + $0x18] sm:$0xff]
        %v1315 = vld [vmem:[%s1121 + $0x3] sm:$0x1]
        %v1316 = vperm.slane %v1315, 0
        %v1318 = vsel %vm500, %v1299, 0
        %v1321 = vsel %vm500, %v1302, 0
        %v1324 = vsel %vm500, %v1305, 0
        %v1327 = vsel %vm500, %v1308, 0
        %1329 = vmatpush.msra.mxu0 0.0
        %1330 = vmatpush.msra.mxu0 0.0
        %1331 = vmatpush.msra.mxu0 0.0
        %1332 = vmatpush.msra.mxu0 0.0
        %1333 = vmatpush.msra.mxu0 0.0
        %1334 = vmatpush.msra.mxu0 0.0
        %1335 = vmatpush.msra.mxu0 0.0
        %1336 = vmatpush.msra.mxu0 0.0
        %1337 = vmatpush.msra.mxu0 0.0
        %1338 = vmatpush.msra.mxu0 0.0
        %1339 = vmatpush.msra.mxu0 0.0
        %1340 = vmatpush.msra.mxu0 0.0
        %1341 = vmatpush.msra.mxu0 %v1314
        %1342 = vmatpush.msra.mxu0 %v1313
        %1343 = vmatpush.msra.mxu0 %v1312
        %1344 = vmatpush.msra.mxu0 %v1311
        %1345 = vmatmul.f32.gmra.mxu0 %v1318
        %v1346 = vpop.f32.mrf.mxu0
        %v1347 = vadd.f32 %v1316, %v1346
        %1348 = vmatmul.f32.gmra.mxu0 %v1321
        %v1349 = vpop.f32.mrf.mxu0
        %v1350 = vadd.f32 %v1316, %v1349
        %1351 = vmatmul.f32.gmra.mxu0 %v1324
        %v1352 = vpop.f32.mrf.mxu0
        %v1353 = vadd.f32 %v1316, %v1352
        %1354 = vmatmul.f32.gmra.mxu0 %v1327
        %v1355 = vpop.f32.mrf.mxu0
        %v1356 = vadd.f32 %v1316, %v1355
        %1357 = vdwg.mxu0
        %v1358 = vmax.f32 %v1347, 0.0
        %v1359 = vmax.f32 %v1350, 0.0
        %v1360 = vmax.f32 %v1353, 0.0
        %v1361 = vmax.f32 %v1356, 0.0
        %v1362 = vadd.f32 %v472, %v1358
        %v1363 = vadd.f32 %v475, %v1359
        %v1364 = vadd.f32 %v478, %v1360
        %v1365 = vadd.f32 %v481, %v1361
        %v1366 = vld [vmem:[%s1121 + $0x6] sm:$0x1]
        %v1367 = vld [vmem:[%s1121 + $0x7] sm:$0x1]
        %v1368 = vsel %vm500, %v1362, 0.0
        %1369 = vadd.xlane.f32.xlu0 %v1368
        %v1370 = vpop.xlane.xlu0 %1369
        %v1371 = vsel %vm500, %v1363, 0.0
        %1372 = vadd.xlane.f32.xlu0 %v1371
        %v1373 = vpop.xlane.xlu0 %1372
        %v1374 = vsel %vm500, %v1364, 0.0
        %1375 = vadd.xlane.f32.xlu0 %v1374
        %v1376 = vpop.xlane.xlu0 %1375
        %v1377 = vsel %vm500, %v1365, 0.0
        %1378 = vadd.xlane.f32.xlu0 %v1377
        %v1379 = vpop.xlane.xlu0 %1378
        %v1380 = vmul.f32 %v1370, %v830
        %v1381 = vmul.f32 %v1373, %v830
        %v1382 = vmul.f32 %v1376, %v830
        %v1383 = vmul.f32 %v1379, %v830
        %v1384 = vsub.f32 %v1362, %v1380
        %v1385 = vsub.f32 %v1363, %v1381
        %v1386 = vsub.f32 %v1364, %v1382
        %v1387 = vsub.f32 %v1365, %v1383
        %v1388 = vmul.f32 %v1384, %v1384
        %v1389 = vmul.f32 %v1385, %v1385
        %v1390 = vmul.f32 %v1386, %v1386
        %v1391 = vmul.f32 %v1387, %v1387
        %v1392 = vsel %vm500, %v1388, 0.0
        %1393 = vadd.xlane.f32.xlu0 %v1392
        %v1394 = vpop.xlane.xlu0 %1393
        %v1395 = vsel %vm500, %v1389, 0.0
        %1396 = vadd.xlane.f32.xlu0 %v1395
        %v1397 = vpop.xlane.xlu0 %1396
        %v1398 = vsel %vm500, %v1390, 0.0
        %1399 = vadd.xlane.f32.xlu0 %v1398
        %v1400 = vpop.xlane.xlu0 %1399
        %v1401 = vsel %vm500, %v1391, 0.0
        %1402 = vadd.xlane.f32.xlu0 %v1401
        %v1403 = vpop.xlane.xlu0 %1402
        %v1404 = vmul.f32 %v1394, %v830
        %v1405 = vmul.f32 %v1397, %v830
        %v1406 = vmul.f32 %v1400, %v830
        %v1407 = vmul.f32 %v1403, %v830
        %v1408 = vadd.f32 %v1404, 1e-05
        %v1409 = vadd.f32 %v1405, 1e-05
        %v1410 = vadd.f32 %v1406, 1e-05
        %v1411 = vadd.f32 %v1407, 1e-05
        %v1412 = vrsqrt.pop %v1408
        %v1413 = vmul.f32 %v1412, %v1408
        %v1414 = vmul.f32 %v1413, %v1412
        %v1415 = vmul.f32 0.5, %v1414
        %v1416 = vsub.f32 1.5, %v1415
        %v1417 = vmul.f32 %v1412, %v1416
        %vm1418 = vweird.f32 %v1408
        %vm1419 = vweird.f32 %v1412
        %vm1420 = vmor %vm1418, %vm1419
        %v1421 = vsel %vm1420, %v1412, %v1417
        %v1422 = vrsqrt.pop %v1409
        %v1423 = vmul.f32 %v1422, %v1409
        %v1424 = vmul.f32 %v1423, %v1422
        %v1425 = vmul.f32 0.5, %v1424
        %v1426 = vsub.f32 1.5, %v1425
        %v1427 = vmul.f32 %v1422, %v1426
        %vm1428 = vweird.f32 %v1409
        %vm1429 = vweird.f32 %v1422
        %vm1430 = vmor %vm1428, %vm1429
        %v1431 = vsel %vm1430, %v1422, %v1427
        %v1432 = vrsqrt.pop %v1410
        %v1433 = vmul.f32 %v1432, %v1410
        %v1434 = vmul.f32 %v1433, %v1432
        %v1435 = vmul.f32 0.5, %v1434
        %v1436 = vsub.f32 1.5, %v1435
        %v1437 = vmul.f32 %v1432, %v1436
        %vm1438 = vweird.f32 %v1410
        %vm1439 = vweird.f32 %v1432
        %vm1440 = vmor %vm1438, %vm1439
        %v1441 = vsel %vm1440, %v1432, %v1437
        %v1442 = vrsqrt.pop %v1411
        %v1443 = vmul.f32 %v1442, %v1411
        %v1444 = vmul.f32 %v1443, %v1442
        %v1445 = vmul.f32 0.5, %v1444
        %v1446 = vsub.f32 1.5, %v1445
        %v1447 = vmul.f32 %v1442, %v1446
        %vm1448 = vweird.f32 %v1411
        %vm1449 = vweird.f32 %v1442
        %vm1450 = vmor %vm1448, %vm1449
        %v1451 = vsel %vm1450, %v1442, %v1447
        %v1452 = vmul.f32 %v1384, %v1421
        %v1453 = vmul.f32 %v1385, %v1431
        %v1454 = vmul.f32 %v1386, %v1441
        %v1455 = vmul.f32 %v1387, %v1451
        %v1456 = vperm.slane %v1366, 0
        %v1457 = vmul.f32 %v1452, %v1456
        %v1458 = vmul.f32 %v1453, %v1456
        %v1459 = vmul.f32 %v1454, %v1456
        %v1460 = vmul.f32 %v1455, %v1456
        %v1461 = vperm.slane %v1367, 0
        %v1462 = vadd.f32 %v1457, %v1461
        %v1463 = vadd.f32 %v1458, %v1461
        %v1464 = vadd.f32 %v1459, %v1461
        %v1465 = vadd.f32 %v1460, %v1461
        %s1466 = scalar_lea.vmem [#allocation7], 128
        %v1467 = vld [vmem:[%s1466] sm:$0xff]
        %v1468 = vld [vmem:[%s1466 + $0x8] sm:$0xff]
        %v1469 = vld [vmem:[%s1466 + $0x10] sm:$0xff]
        %v1470 = vld [vmem:[%s1466 + $0x18] sm:$0xff]
        %v1471 = vld [vmem:[%s1121 + $0x4] sm:$0x1]
        %v1472 = vperm.slane %v1471, 0
        %v1474 = vsel %vm500, %v1462, 0
        %v1477 = vsel %vm500, %v1463, 0
        %v1480 = vsel %vm500, %v1464, 0
        %v1483 = vsel %vm500, %v1465, 0
        %1485 = vmatpush.msra.mxu0 0.0
        %1486 = vmatpush.msra.mxu0 0.0
        %1487 = vmatpush.msra.mxu0 0.0
        %1488 = vmatpush.msra.mxu0 0.0
        %1489 = vmatpush.msra.mxu0 0.0
        %1490 = vmatpush.msra.mxu0 0.0
        %1491 = vmatpush.msra.mxu0 0.0
        %1492 = vmatpush.msra.mxu0 0.0
        %1493 = vmatpush.msra.mxu0 0.0
        %1494 = vmatpush.msra.mxu0 0.0
        %1495 = vmatpush.msra.mxu0 0.0
        %1496 = vmatpush.msra.mxu0 0.0
        %1497 = vmatpush.msra.mxu0 %v1470
        %1498 = vmatpush.msra.mxu0 %v1469
        %1499 = vmatpush.msra.mxu0 %v1468
        %1500 = vmatpush.msra.mxu0 %v1467
        %1501 = vmatmul.f32.gmra.mxu0 %v1474
        %v1502 = vpop.f32.mrf.mxu0
        %v1503 = vadd.f32 %v1472, %v1502
        %1504 = vmatmul.f32.gmra.mxu0 %v1477
        %v1505 = vpop.f32.mrf.mxu0
        %v1506 = vadd.f32 %v1472, %v1505
        %1507 = vmatmul.f32.gmra.mxu0 %v1480
        %v1508 = vpop.f32.mrf.mxu0
        %v1509 = vadd.f32 %v1472, %v1508
        %1510 = vmatmul.f32.gmra.mxu0 %v1483
        %v1511 = vpop.f32.mrf.mxu0
        %v1512 = vadd.f32 %v1472, %v1511
        %1513 = vdwg.mxu0
        %v1514 = vmax.f32 %v1503, 0.0
        %v1515 = vmax.f32 %v1506, 0.0
        %v1516 = vmax.f32 %v1509, 0.0
        %v1517 = vmax.f32 %v1512, 0.0
        %s1518 = scalar_lea.vmem [#allocation7], 160
        %v1519 = vld [vmem:[%s1518] sm:$0xff]
        %v1520 = vld [vmem:[%s1518 + $0x8] sm:$0xff]
        %v1521 = vld [vmem:[%s1518 + $0x10] sm:$0xff]
        %v1522 = vld [vmem:[%s1518 + $0x18] sm:$0xff]
        %v1523 = vld [vmem:[%s1121 + $0x5] sm:$0x1]
        %v1524 = vperm.slane %v1523, 0
        %v1526 = vsel %vm500, %v1514, 0
        %v1529 = vsel %vm500, %v1515, 0
        %v1532 = vsel %vm500, %v1516, 0
        %v1535 = vsel %vm500, %v1517, 0
        %1537 = vmatpush.msra.mxu0 0.0
        %1538 = vmatpush.msra.mxu0 0.0
        %1539 = vmatpush.msra.mxu0 0.0
        %1540 = vmatpush.msra.mxu0 0.0
        %1541 = vmatpush.msra.mxu0 0.0
        %1542 = vmatpush.msra.mxu0 0.0
        %1543 = vmatpush.msra.mxu0 0.0
        %1544 = vmatpush.msra.mxu0 0.0
        %1545 = vmatpush.msra.mxu0 0.0
        %1546 = vmatpush.msra.mxu0 0.0
        %1547 = vmatpush.msra.mxu0 0.0
        %1548 = vmatpush.msra.mxu0 0.0
        %1549 = vmatpush.msra.mxu0 %v1522
        %1550 = vmatpush.msra.mxu0 %v1521
        %1551 = vmatpush.msra.mxu0 %v1520
        %1552 = vmatpush.msra.mxu0 %v1519
        %1553 = vmatmul.f32.gmra.mxu0 %v1526
        %v1554 = vpop.f32.mrf.mxu0
        %v1555 = vadd.f32 %v1524, %v1554
        %1556 = vmatmul.f32.gmra.mxu0 %v1529
        %v1557 = vpop.f32.mrf.mxu0
        %v1558 = vadd.f32 %v1524, %v1557
        %1559 = vmatmul.f32.gmra.mxu0 %v1532
        %v1560 = vpop.f32.mrf.mxu0
        %v1561 = vadd.f32 %v1524, %v1560
        %1562 = vmatmul.f32.gmra.mxu0 %v1535
        %v1563 = vpop.f32.mrf.mxu0
        %v1564 = vadd.f32 %v1524, %v1563
        %1565 = vdwg.mxu0
        %v1566 = vadd.f32 %v1462, %v1555
        %v1567 = vadd.f32 %v1463, %v1558
        %v1568 = vadd.f32 %v1464, %v1561
        %v1569 = vadd.f32 %v1465, %v1564
        %v1570 = vld [vmem:[%s1121 + $0x8] sm:$0x1]
        %v1571 = vld [vmem:[%s1121 + $0x9] sm:$0x1]
        %v1572 = vsel %vm500, %v1566, 0.0
        %1573 = vadd.xlane.f32.xlu0 %v1572
        %v1574 = vpop.xlane.xlu0 %1573
        %v1575 = vsel %vm500, %v1567, 0.0
        %1576 = vadd.xlane.f32.xlu0 %v1575
        %v1577 = vpop.xlane.xlu0 %1576
        %v1578 = vsel %vm500, %v1568, 0.0
        %1579 = vadd.xlane.f32.xlu0 %v1578
        %v1580 = vpop.xlane.xlu0 %1579
        %v1581 = vsel %vm500, %v1569, 0.0
        %1582 = vadd.xlane.f32.xlu0 %v1581
        %v1583 = vpop.xlane.xlu0 %1582
        %v1584 = vmul.f32 %v1574, %v830
        %v1585 = vmul.f32 %v1577, %v830
        %v1586 = vmul.f32 %v1580, %v830
        %v1587 = vmul.f32 %v1583, %v830
        %v1588 = vsub.f32 %v1566, %v1584
        %v1589 = vsub.f32 %v1567, %v1585
        %v1590 = vsub.f32 %v1568, %v1586
        %v1591 = vsub.f32 %v1569, %v1587
        %v1592 = vmul.f32 %v1588, %v1588
        %v1593 = vmul.f32 %v1589, %v1589
        %v1594 = vmul.f32 %v1590, %v1590
        %v1595 = vmul.f32 %v1591, %v1591
        %v1596 = vsel %vm500, %v1592, 0.0
        %1597 = vadd.xlane.f32.xlu0 %v1596
        %v1598 = vpop.xlane.xlu0 %1597
        %v1599 = vsel %vm500, %v1593, 0.0
        %1600 = vadd.xlane.f32.xlu0 %v1599
        %v1601 = vpop.xlane.xlu0 %1600
        %v1602 = vsel %vm500, %v1594, 0.0
        %1603 = vadd.xlane.f32.xlu0 %v1602
        %v1604 = vpop.xlane.xlu0 %1603
        %v1605 = vsel %vm500, %v1595, 0.0
        %1606 = vadd.xlane.f32.xlu0 %v1605
        %v1607 = vpop.xlane.xlu0 %1606
        %v1608 = vmul.f32 %v1598, %v830
        %v1609 = vmul.f32 %v1601, %v830
        %v1610 = vmul.f32 %v1604, %v830
        %v1611 = vmul.f32 %v1607, %v830
        %v1612 = vadd.f32 %v1608, 1e-05
        %v1613 = vadd.f32 %v1609, 1e-05
        %v1614 = vadd.f32 %v1610, 1e-05
        %v1615 = vadd.f32 %v1611, 1e-05
        %v1616 = vrsqrt.pop %v1612
        %v1617 = vmul.f32 %v1616, %v1612
        %v1618 = vmul.f32 %v1617, %v1616
        %v1619 = vmul.f32 0.5, %v1618
        %v1620 = vsub.f32 1.5, %v1619
        %v1621 = vmul.f32 %v1616, %v1620
        %vm1622 = vweird.f32 %v1612
        %vm1623 = vweird.f32 %v1616
        %vm1624 = vmor %vm1622, %vm1623
        %v1625 = vsel %vm1624, %v1616, %v1621
        %v1626 = vrsqrt.pop %v1613
        %v1627 = vmul.f32 %v1626, %v1613
        %v1628 = vmul.f32 %v1627, %v1626
        %v1629 = vmul.f32 0.5, %v1628
        %v1630 = vsub.f32 1.5, %v1629
        %v1631 = vmul.f32 %v1626, %v1630
        %vm1632 = vweird.f32 %v1613
        %vm1633 = vweird.f32 %v1626
        %vm1634 = vmor %vm1632, %vm1633
        %v1635 = vsel %vm1634, %v1626, %v1631
        %v1636 = vrsqrt.pop %v1614
        %v1637 = vmul.f32 %v1636, %v1614
        %v1638 = vmul.f32 %v1637, %v1636
        %v1639 = vmul.f32 0.5, %v1638
        %v1640 = vsub.f32 1.5, %v1639
        %v1641 = vmul.f32 %v1636, %v1640
        %vm1642 = vweird.f32 %v1614
        %vm1643 = vweird.f32 %v1636
        %vm1644 = vmor %vm1642, %vm1643
        %v1645 = vsel %vm1644, %v1636, %v1641
        %v1646 = vrsqrt.pop %v1615
        %v1647 = vmul.f32 %v1646, %v1615
        %v1648 = vmul.f32 %v1647, %v1646
        %v1649 = vmul.f32 0.5, %v1648
        %v1650 = vsub.f32 1.5, %v1649
        %v1651 = vmul.f32 %v1646, %v1650
        %vm1652 = vweird.f32 %v1615
        %vm1653 = vweird.f32 %v1646
        %vm1654 = vmor %vm1652, %vm1653
        %v1655 = vsel %vm1654, %v1646, %v1651
        %v1656 = vmul.f32 %v1588, %v1625
        %v1657 = vmul.f32 %v1589, %v1635
        %v1658 = vmul.f32 %v1590, %v1645
        %v1659 = vmul.f32 %v1591, %v1655
        %v1660 = vperm.slane %v1570, 0
        %v1661 = vmul.f32 %v1656, %v1660
        %v1662 = vmul.f32 %v1657, %v1660
        %v1663 = vmul.f32 %v1658, %v1660
        %v1664 = vmul.f32 %v1659, %v1660
        %v1665 = vperm.slane %v1571, 0
        %v1666 = vadd.f32 %v1661, %v1665
        %v1667 = vadd.f32 %v1662, %v1665
        %v1668 = vadd.f32 %v1663, %v1665
        %v1669 = vadd.f32 %v1664, %v1665
        %v1670 = vld [vmem:[%s5 + $0xa] sm:$0x1]
        %v1671 = vperm.slane %v1670, 0
        %v1672 = vmul.f32 %v1117, %v1671
        %v1673 = vmul.f32 %v1118, %v1671
        %v1674 = vmul.f32 %v1119, %v1671
        %v1675 = vmul.f32 %v1120, %v1671
        %v1676 = vld [vmem:[%s1121 + $0xa] sm:$0x1]
        %v1677 = vperm.slane %v1676, 0
        %v1678 = vmul.f32 %v1666, %v1677
        %v1679 = vmul.f32 %v1667, %v1677
        %v1680 = vmul.f32 %v1668, %v1677
        %v1681 = vmul.f32 %v1669, %v1677
        %v1682 = vadd.f32 %v1672, %v1678
        %v1683 = vadd.f32 %v1673, %v1679
        %v1684 = vadd.f32 %v1674, %v1680
        %v1685 = vadd.f32 %v1675, %v1681
        %v1686 = vld [vmem:[%s7] sm:$0xf]
        %v1688 = vrot.slane %v1686, 1
        %v1689 = vrot.slane %v1686, 2
        %v1690 = vrot.slane %v1686, 3
        %v1691 = vperm.slane %v1686, 0
        %v1692 = vperm.slane %v1688, 0
        %v1693 = vperm.slane %v1689, 0
        %v1694 = vperm.slane %v1690, 0
        %v1699 = vmul.f32 %v1682, %v1691
        %v1700 = vmul.f32 %v1683, %v1692
        %v1701 = vmul.f32 %v1684, %v1693
        %v1702 = vmul.f32 %v1685, %v1694
        %v1703 = vsel %vm500, %v1699, 0.0
        %1704 = vadd.xlane.f32.xlu0 %v1703
        %v1705 = vpop.xlane.xlu0 %1704
        %v1706 = vsel %vm500, %v1700, 0.0
        %1707 = vadd.xlane.f32.xlu0 %v1706
        %v1708 = vpop.xlane.xlu0 %1707
        %v1709 = vsel %vm500, %v1701, 0.0
        %1710 = vadd.xlane.f32.xlu0 %v1709
        %v1711 = vpop.xlane.xlu0 %1710
        %v1712 = vsel %vm500, %v1702, 0.0
        %1713 = vadd.xlane.f32.xlu0 %v1712
        %v1714 = vpop.xlane.xlu0 %1713
        %v1715 = vld [vmem:[%s8] sm:$0xf]
        %1717 = vset.pattern.permute.xlu0 0
        %1718 = vperm.xlu0 %1717, %v1715
        %v1719 = vpop.permute.xlu0 %1718
        %v1720 = vperm.slane %v1719, 0
        %v1721 = vperm.slane %v1719, 1
        %v1722 = vperm.slane %v1719, 2
        %v1723 = vperm.slane %v1719, 3
        %v1728 = vadd.f32 %v1705, %v1720
        %v1729 = vadd.f32 %v1708, %v1721
        %v1730 = vadd.f32 %v1711, %v1722
        %v1731 = vadd.f32 %v1714, %v1723
        %1736 = vset.pattern.permute.xlu0 0
        %1737 = vperm.xlu0 %1736, %v1728
        %v1738 = vpop.permute.xlu0 %1737
        %1739 = vset.pattern.permute.xlu0 0
        %1740 = vperm.xlu0 %1739, %v1729
        %v1741 = vpop.permute.xlu0 %1740
        %1742 = vset.pattern.permute.xlu0 0
        %1743 = vperm.xlu0 %1742, %v1730
        %v1744 = vpop.permute.xlu0 %1743
        %1745 = vset.pattern.permute.xlu0 0
        %1746 = vperm.xlu0 %1745, %v1731
        %v1747 = vpop.permute.xlu0 %1746
        %v1748 = vlaneseq
        %v1749 = vand.u32 %v1748, 127
        %v1750 = vperm.slane %v1738, %v1749
        %v1751 = vperm.slane %v1741, %v1749
        %v1752 = vperm.slane %v1744, %v1749
        %v1753 = vperm.slane %v1747, %v1749
        %vm1754 = vcmask 1041409
        %v1755 = vsel %vm1754, %v1751, %v1750
        %vm1756 = vcmask 1042434
        %v1757 = vsel %vm1756, %v1752, %v1755
        %vm1758 = vcmask 1043459
        %v1759 = vsel %vm1758, %v1753, %v1757
        %vm1761 = vcmask 60416
        %v1762 = vsel %vm1761, %v1759, -inf
        %1763 = vmax.xlane.f32.xlu0 %v1762
        %v1764 = vpop.xlane.xlu0 %1763
        %v1766 = vperm.slane %v1764, %v1749
        %vm1768 = vcmask 24576
        %1769 = vst.msk [vmem:[%s391] sm:$0x1] %vm1768, %v1766
        %s1770 = sand.u32 %s228, 1
        %s1771 = scalar_lea.sflag [#allocation4], %s1770
        %s1772 = sand.u32 %s228, 1
        %s1773 = scalar_lea.vmem [#allocation10], %s1772
        // Predicated region
        $region73: #{video_transformer_forward.1} parent=55 // pred_check
          %p1774 = pneg %p238
        $region74: #{video_transformer_forward.1} parent=55 // pred_check_branch
          %1776 = sbr.rel (%p1774) target = $region76
        $region75: #{video_transformer_forward.1} parent=55 // pred_region
          %1778 = vsyncadd %s1771, 0
          %s1779 = scalar_lea.hbm %s9, %s26
          %s1781 = sshll.u32 %s1773, 4
          %s1782 = int_to_ptr.vmem [resolvable:$true] %s1781
          %s1783 = sshll.u32 %s1779, 4
          %s1784 = int_to_ptr.hbm [resolvable:$true] %s1783
          %1786 = dma.vmem_to_hbm [thread:$0]  %s1782, 16, %s1784, %s1771
        $region76: #{video_transformer_forward.1} parent=55 // pred_fallthru
          _
      $region56: #{video_transformer_forward.1} parent=5 // pred_fallthru
        _
      %p1787 = scmp.le.s32.totalorder 2, %s21
      // Predicated region
      $region77: #{video_transformer_forward.1} parent=5 // pred_check
        %p1788 = pneg %p1787
      $region78: #{video_transformer_forward.1} parent=5 // pred_check_branch
        %1790 = sbr.rel (%p1788) target = $region80
      $region79: #{video_transformer_forward.1} parent=5 // pred_region
        %s1791 = ssub.s32 %s21, 2
        // Predicated region
        $region81: #{video_transformer_forward.1} parent=79 // pred_check
          %p1792 = pneg %p244
        $region82: #{video_transformer_forward.1} parent=79 // pred_check_branch
          %1794 = sbr.rel (%p1792) target = $region84
        $region83: #{video_transformer_forward.1} parent=79 // pred_region
          %s1795 = sand.u32 %s229, 1
          %s1796 = scalar_lea.sflag [#allocation4], %s1795
          %s1797 = sand.u32 %s229, 1
          %s1798 = scalar_lea.vmem [#allocation10], %s1797
          %1800 = dma.done %s1796, 16
        $region84: #{video_transformer_forward.1} parent=79 // pred_fallthru
          _
      $region80: #{video_transformer_forward.1} parent=5 // pred_fallthru
        _
    $region6: #{video_transformer_forward.1} parent=1 // loop_footer
      %s25 = sadd.s32 1, %s21
    $region7: #{video_transformer_forward.1} parent=1 // loop_footer_branch
      %20 = sbr.rel target = $region3
    $region8: #{video_transformer_forward.1} parent=1 // loop_exit
      _
    %1801 = vsyncpa [#allocation3], 1
    %s1802 = scalar_lea.sflag [#allocation3], 1
    %1803 = vsyncpa %s1802, 1
    %1804 = vsyncpa [#allocation6], 1
    %1805 = vsyncpa [#allocation9], 1
    %1806 = vsyncpa [#allocation4], 1
    %s1807 = scalar_lea.sflag [#allocation4], 1
    %1808 = vsyncpa %s1807, 1

</llo_original>
